<compile_context>
chip_gen: v7x
topology: tpu7x:2x2x1
jax: 0.10.0
libtpu: 0.0.40
codegen_flags: <defaults>
</compile_context>

<pallas_src>
import math
import functools

import jax
import jax.numpy as jnp
from jax.experimental import pallas as pl
from jax.experimental.pallas import tpu as pltpu


# ----------------------------------------------------------------------------
# Kernel 1: pruner token scorer.
#   score[b, s] = sum_h( tanh(e[b, s] @ W1)[h] * w2[h] )
# Lane-dense (B, S) output: the final projection is a VPU multiply + lane
# reduction instead of a 1-column MXU matmul + width-1 masked stores.
# ----------------------------------------------------------------------------
def _scorer_kernel(x_ref, w1_ref, w2_ref, score_ref):
    x = x_ref[...]                                           # (B, S, Ds) f32
    w1 = w1_ref[...]                                         # (Ds, Hs) f32
    w2 = w2_ref[...]                                         # (1, Hs)  f32
    h = jnp.tanh(jnp.einsum("bsd,dh->bsh", x, w1,
                            preferred_element_type=jnp.float32))  # (B, S, Hs)
    s = jnp.sum(h * w2.reshape(1, 1, -1), axis=-1)           # (B, S)
    score_ref[...] = s


def score_tokens(emb_small, w1, w2_row):
    B, S, _ = emb_small.shape
    return pl.pallas_call(
        _scorer_kernel,
        out_shape=jax.ShapeDtypeStruct((B, S), jnp.float32),
    )(emb_small, w1, w2_row)


# ----------------------------------------------------------------------------
# Kernel 2 (fused): pre-RMSNorm transformer block (causal + key-padding-masked
# self-attention, GELU MLP) followed by the LM head.  Single invocation; all
# row-wise projections run on the flattened (B*S, D) matrix so the MXU sees
# B*S rows instead of S.  bf16 MXU inputs, f32 accumulators / elementwise.
# Note: the 1/sqrt(D) attention scale is folded into wq at init time.
# ----------------------------------------------------------------------------
def _main_kernel(x_ref, mask_ref, wq_ref, wk_ref, wv_ref, wo_ref,
                 w1_ref, w2_ref, g1_ref, g2_ref, wlm_ref, logits_ref):
    eps = 1e-6
    B, S, D = x_ref.shape
    V = wlm_ref.shape[1]
    BS = B * S

    xf = x_ref[...].reshape(BS, D).astype(jnp.float32)       # residual, f32

    def rms(v, g_ref):
        ms = jnp.mean(v * v, axis=-1, keepdims=True)
        return v * jax.lax.rsqrt(ms + eps) * g_ref[...].astype(jnp.float32)

    # --- attention -----------------------------------------------------------
    xn = rms(xf, g1_ref).astype(jnp.bfloat16)                # (BS, D) bf16
    q = jnp.dot(xn, wq_ref[...], preferred_element_type=jnp.float32)
    k = jnp.dot(xn, wk_ref[...], preferred_element_type=jnp.float32)
    v = jnp.dot(xn, wv_ref[...], preferred_element_type=jnp.float32)

    qb = q.reshape(B, S, D).astype(jnp.bfloat16)
    kb = k.reshape(B, S, D).astype(jnp.bfloat16)
    vb = v.reshape(B, S, D).astype(jnp.bfloat16)

    scores = jnp.einsum("bqd,bkd->bqk", qb, kb,
                        preferred_element_type=jnp.float32)  # (B, S, S) f32
    row = jax.lax.broadcasted_iota(jnp.int32, (B, S, S), 1)
    col = jax.lax.broadcasted_iota(jnp.int32, (B, S, S), 2)
    kmask = (mask_ref[...] > 0)[:, None, :]                  # (B, 1, S) keys
    scores = jnp.where((col <= row) & kmask, scores, -1e30)

    scores = scores - jnp.max(scores, axis=-1, keepdims=True)
    p = jnp.exp(scores)
    p = p * pl.reciprocal(jnp.sum(p, axis=-1, keepdims=True), approx=True)

    attn = jnp.einsum("bqk,bkd->bqd", p.astype(jnp.bfloat16), vb,
                      preferred_element_type=jnp.float32)    # (B, S, D) f32
    xf = xf + jnp.dot(attn.reshape(BS, D).astype(jnp.bfloat16), wo_ref[...],
                      preferred_element_type=jnp.float32)

    # --- MLP -----------------------------------------------------------------
    xn2 = rms(xf, g2_ref).astype(jnp.bfloat16)
    h = jnp.dot(xn2, w1_ref[...], preferred_element_type=jnp.float32)
    h = jax.nn.gelu(h)                                       # f32 elementwise
    m = jnp.dot(h.astype(jnp.bfloat16), w2_ref[...],
                preferred_element_type=jnp.float32)
    xf = xf + m

    # --- LM head -------------------------------------------------------------
    logits = jnp.dot(xf.astype(jnp.bfloat16), wlm_ref[...],
                     preferred_element_type=jnp.float32)     # (BS, V)
    logits_ref[...] = logits.reshape(B, S, V).astype(logits_ref.dtype)


def fused_block_lm_head(x, attention_mask, p):
    # Single invocation: at these shapes everything fits in VMEM easily.
    # TODO(synk): at real LM shapes, tile the (D, V) LM-head weight over a
    # "parallel" vocab grid axis (v7x: 64 MiB VMEM, 2 TCs) and set
    # vmem_limit_bytes explicitly.
    B, S, D = x.shape
    V = p["w_lm"].shape[1]
    return pl.pallas_call(
        _main_kernel,
        out_shape=jax.ShapeDtypeStruct((B, S, V), x.dtype),
    )(x, attention_mask.astype(jnp.int32),
      p["wq"], p["wk"], p["wv"], p["wo"],
      p["w1"], p["w2"], p["g1"], p["g2"], p["w_lm"])


# ----------------------------------------------------------------------------
# Model glue (plain JAX): embedding gathers, top-k pruning, parameter setup.
# ----------------------------------------------------------------------------
def main_model_forward(p, input_ids, attention_mask):
    x = jnp.take(p["emb"], input_ids, axis=0)                # (B, S, D) bf16
    return fused_block_lm_head(x, attention_mask, p)         # (B, S, V) logits


def prune_tokens(pruner_params, input_ids, attention_mask, compression_ratio):
    B, S = input_ids.shape
    keep = max(1, int(round(S * compression_ratio)))
    # Pad the pruned length up to a multiple of 8 so the main-model block keeps
    # full sublane tiles; padded positions carry attention_mask == 0.
    keep_pad = min(S, -(-keep // 8) * 8)

    emb_s = jnp.take(pruner_params["emb"], input_ids, axis=0)    # (B, S, Ds)
    scores = score_tokens(emb_s, pruner_params["w1"], pruner_params["w2"])
    scores = jnp.where(attention_mask > 0, scores, -jnp.inf)
    _, idx = jax.lax.top_k(scores, keep)
    idx = jnp.sort(idx, axis=-1)                                 # keep order
    pruned_ids = jnp.take_along_axis(input_ids, idx, axis=-1)
    pruned_mask = jnp.take_along_axis(attention_mask, idx, axis=-1)
    if keep_pad > keep:
        pad = keep_pad - keep
        pruned_ids = jnp.pad(pruned_ids, ((0, 0), (0, pad)))     # id 0, masked
        pruned_mask = jnp.pad(pruned_mask, ((0, 0), (0, pad)))
    return pruned_ids, pruned_mask, keep


def pruned_model_forward(params, input_ids, attention_mask, compression_ratio):
    if compression_ratio == 1.0:
        return main_model_forward(params["main"], input_ids, attention_mask)
    pruned_ids, pruned_mask, keep = prune_tokens(
        params["pruner"], input_ids, attention_mask, compression_ratio)
    logits = main_model_forward(params["main"], pruned_ids, pruned_mask)
    return logits[:, :keep]                                   # drop pad rows


def init_params(key, vocab=256, d=128, f=256, ds=64, hs=128):
    ks = jax.random.split(key, 12)

    def w(k, shape, scale, dtype=jnp.bfloat16):
        return (jax.random.normal(k, shape, jnp.float32) * scale).astype(dtype)

    attn_scale = 1.0 / math.sqrt(d)   # folded into wq: no S x S scale in-kernel
    main = {
        "emb": w(ks[0], (vocab, d), 0.02),
        "wq": w(ks[1], (d, d), (d ** -0.5) * attn_scale),
        "wk": w(ks[2], (d, d), d ** -0.5),
        "wv": w(ks[3], (d, d), d ** -0.5),
        "wo": w(ks[4], (d, d), d ** -0.5),
        "w1": w(ks[5], (d, f), d ** -0.5),
        "w2": w(ks[6], (f, d), f ** -0.5),
        "g1": jnp.ones((1, d), jnp.bfloat16),
        "g2": jnp.ones((1, d), jnp.bfloat16),
        "w_lm": w(ks[7], (d, vocab), d ** -0.5),
    }
    pruner = {
        "emb": w(ks[8], (vocab, ds), 0.02, jnp.float32),
        "w1": w(ks[9], (ds, hs), ds ** -0.5, jnp.float32),
        "w2": w(ks[10], (1, hs), hs ** -0.5, jnp.float32),   # row vector
    }
    return {"main": main, "pruner": pruner}


if __name__ == "__main__":
    key = jax.random.PRNGKey(0)
    pkey, ikey = jax.random.split(key)

    VOCAB, D, F, DS, HS = 256, 128, 256, 64, 128
    B, S = 2, 8
    COMPRESSION_RATIO = 0.5

    params = init_params(pkey, vocab=VOCAB, d=D, f=F, ds=DS, hs=HS)
    input_ids = jax.random.randint(ikey, (B, S), 0, VOCAB, dtype=jnp.int32)
    attention_mask = jnp.ones((B, S), dtype=jnp.int32)

    # Pruned path (compression_ratio < 1.0): score -> top-k prune -> main LM.
    fwd = jax.jit(functools.partial(pruned_model_forward,
                                    compression_ratio=COMPRESSION_RATIO))
    logits_pruned = fwd(params, input_ids, attention_mask)
    jax.block_until_ready(logits_pruned)
    keep = max(1, int(round(S * COMPRESSION_RATIO)))
    assert logits_pruned.shape == (B, keep, VOCAB)

    # Passthrough path (compression_ratio == 1.0): main LM directly.
    fwd_full = jax.jit(functools.partial(pruned_model_forward,
                                         compression_ratio=1.0))
    logits_full = fwd_full(params, input_ids, attention_mask)
    jax.block_until_ready(logits_full)
    assert logits_full.shape == (B, S, VOCAB)

    print("KERNEL_OK")
</pallas_src>

<mosaic_0001>
module attributes {stable_mosaic.version = 11 : i64} {
  func.func @_scorer_kernel(%arg0: memref<2x8x64xf32, #tpu.memory_space<vmem>>, %arg1: memref<64x128xf32, #tpu.memory_space<vmem>>, %arg2: memref<1x128xf32, #tpu.memory_space<vmem>>, %arg3: memref<2x8xf32, #tpu.memory_space<vmem>>) attributes {dimension_semantics = [], scalar_prefetch = 0 : i64, scratch_operands = 0 : i64, tpu.core_type = #tpu.core_type<tc>} {
    %c0 = arith.constant 0 : index
    %c0_0 = arith.constant 0 : index
    %c0_1 = arith.constant 0 : index
    %0 = vector.load %arg0[%c0, %c0_0, %c0_1] : memref<2x8x64xf32, #tpu.memory_space<vmem>>, vector<2x8x64xf32>
    %c0_2 = arith.constant 0 : index
    %c0_3 = arith.constant 0 : index
    %1 = vector.load %arg1[%c0_2, %c0_3] : memref<64x128xf32, #tpu.memory_space<vmem>>, vector<64x128xf32>
    %c0_4 = arith.constant 0 : index
    %c0_5 = arith.constant 0 : index
    %2 = vector.load %arg2[%c0_4, %c0_5] : memref<1x128xf32, #tpu.memory_space<vmem>>, vector<1x128xf32>
    "tpu.trace_start"() <{level = 10 : i32, message = "bsd,dh->bsh"}> : () -> ()
    %cst = arith.constant dense<0.000000e+00> : vector<2x8x128xf32>
    %3 = tpu.matmul %0, %1, %cst {dimension_numbers = #tpu.dot_dimension_numbers<[2], [0], [0, 1], [1], [0, 0, 0, 1, 1, 1], [], []>} : vector<2x8x64xf32>, vector<64x128xf32>, vector<2x8x128xf32> -> vector<2x8x128xf32>
    "tpu.trace_stop"() : () -> ()
    %4 = math.tanh %3 : vector<2x8x128xf32>
    %5 = vector.shape_cast %2 : vector<1x128xf32> to vector<1x1x128xf32>
    %6 = vector.broadcast %5 : vector<1x1x128xf32> to vector<2x8x128xf32>
    %7 = arith.mulf %4, %6 : vector<2x8x128xf32>
    %cst_6 = arith.constant dense<0.000000e+00> : vector<2x8xf32>
    %8 = vector.multi_reduction <add>, %7, %cst_6 [2] : vector<2x8x128xf32> to vector<2x8xf32>
    %c0_7 = arith.constant 0 : index
    %c0_8 = arith.constant 0 : index
    %9 = vector.load %arg3[%c0_7, %c0_8] : memref<2x8xf32, #tpu.memory_space<vmem>>, vector<2x8xf32>
    tpu.vector_store %arg3[%c0_7, %c0_8], %8 {strides = array<i32>} : memref<2x8xf32, #tpu.memory_space<vmem>>, vector<2x8xf32>,
    return
  }
}

module attributes {stable_mosaic.version = 11 : i64} {
  func.func @_main_kernel(%arg0: memref<2x8x128xbf16, #tpu.memory_space<vmem>>, %arg1: memref<2x8xi32, #tpu.memory_space<vmem>>, %arg2: memref<128x128xbf16, #tpu.memory_space<vmem>>, %arg3: memref<128x128xbf16, #tpu.memory_space<vmem>>, %arg4: memref<128x128xbf16, #tpu.memory_space<vmem>>, %arg5: memref<128x128xbf16, #tpu.memory_space<vmem>>, %arg6: memref<128x256xbf16, #tpu.memory_space<vmem>>, %arg7: memref<256x128xbf16, #tpu.memory_space<vmem>>, %arg8: memref<1x128xbf16, #tpu.memory_space<vmem>>, %arg9: memref<1x128xbf16, #tpu.memory_space<vmem>>, %arg10: memref<128x256xbf16, #tpu.memory_space<vmem>>, %arg11: memref<2x8x256xbf16, #tpu.memory_space<vmem>>) attributes {dimension_semantics = [], scalar_prefetch = 0 : i64, scratch_operands = 0 : i64, tpu.core_type = #tpu.core_type<tc>} {
    %c0 = arith.constant 0 : index
    %c0_0 = arith.constant 0 : index
    %c0_1 = arith.constant 0 : index
    %0 = vector.load %arg0[%c0, %c0_0, %c0_1] : memref<2x8x128xbf16, #tpu.memory_space<vmem>>, vector<2x8x128xbf16>
    %1 = vector.shape_cast %0 : vector<2x8x128xbf16> to vector<16x128xbf16>
    %2 = arith.extf %1 : vector<16x128xbf16> to vector<16x128xf32>
    %3 = arith.mulf %2, %2 : vector<16x128xf32>
    %cst = arith.constant dense<0.000000e+00> : vector<16xf32>
    %4 = vector.multi_reduction <add>, %3, %cst [1] : vector<16x128xf32> to vector<16xf32>
    %5 = vector.shape_cast %4 : vector<16xf32> to vector<16x1xf32>
    %cst_2 = arith.constant 1.280000e+02 : f32
    %6 = vector.broadcast %cst_2 : f32 to vector<16x1xf32>
    %7 = arith.divf %5, %6 : vector<16x1xf32>
    %cst_3 = arith.constant 9.99999997E-7 : f32
    %8 = vector.broadcast %cst_3 : f32 to vector<16x1xf32>
    %9 = arith.addf %7, %8 : vector<16x1xf32>
    %10 = math.rsqrt %9 : vector<16x1xf32>
    %11 = vector.broadcast %10 : vector<16x1xf32> to vector<16x128xf32>
    %12 = arith.mulf %2, %11 : vector<16x128xf32>
    %c0_4 = arith.constant 0 : index
    %c0_5 = arith.constant 0 : index
    %13 = vector.load %arg8[%c0_4, %c0_5] : memref<1x128xbf16, #tpu.memory_space<vmem>>, vector<1x128xbf16>
    %14 = arith.extf %13 : vector<1x128xbf16> to vector<1x128xf32>
    %15 = vector.broadcast %14 : vector<1x128xf32> to vector<16x128xf32>
    %16 = arith.mulf %12, %15 : vector<16x128xf32>
    %17 = arith.truncf %16 : vector<16x128xf32> to vector<16x128xbf16>
    %c0_6 = arith.constant 0 : index
    %c0_7 = arith.constant 0 : index
    %18 = vector.load %arg2[%c0_6, %c0_7] : memref<128x128xbf16, #tpu.memory_space<vmem>>, vector<128x128xbf16>
    %cst_8 = arith.constant dense<0.000000e+00> : vector<16x128xf32>
    %19 = tpu.matmul %17, %18, %cst_8 {dimension_numbers = #tpu.dot_dimension_numbers<[1], [0], [0], [1], [0, 0, 1, 1], [], []>} : vector<16x128xbf16>, vector<128x128xbf16>, vector<16x128xf32> -> vector<16x128xf32>
    %c0_9 = arith.constant 0 : index
    %c0_10 = arith.constant 0 : index
    %20 = vector.load %arg3[%c0_9, %c0_10] : memref<128x128xbf16, #tpu.memory_space<vmem>>, vector<128x128xbf16>
    %cst_11 = arith.constant dense<0.000000e+00> : vector<16x128xf32>
    %21 = tpu.matmul %17, %20, %cst_11 {dimension_numbers = #tpu.dot_dimension_numbers<[1], [0], [0], [1], [0, 0, 1, 1], [], []>} : vector<16x128xbf16>, vector<128x128xbf16>, vector<16x128xf32> -> vector<16x128xf32>
    %c0_12 = arith.constant 0 : index
    %c0_13 = arith.constant 0 : index
    %22 = vector.load %arg4[%c0_12, %c0_13] : memref<128x128xbf16, #tpu.memory_space<vmem>>, vector<128x128xbf16>
    %cst_14 = arith.constant dense<0.000000e+00> : vector<16x128xf32>
    %23 = tpu.matmul %17, %22, %cst_14 {dimension_numbers = #tpu.dot_dimension_numbers<[1], [0], [0], [1], [0, 0, 1, 1], [], []>} : vector<16x128xbf16>, vector<128x128xbf16>, vector<16x128xf32> -> vector<16x128xf32>
    %24 = vector.shape_cast %19 : vector<16x128xf32> to vector<2x8x128xf32>
    %25 = arith.truncf %24 : vector<2x8x128xf32> to vector<2x8x128xbf16>
    %26 = vector.shape_cast %21 : vector<16x128xf32> to vector<2x8x128xf32>
    %27 = arith.truncf %26 : vector<2x8x128xf32> to vector<2x8x128xbf16>
    %28 = vector.shape_cast %23 : vector<16x128xf32> to vector<2x8x128xf32>
    %29 = arith.truncf %28 : vector<2x8x128xf32> to vector<2x8x128xbf16>
    "tpu.trace_start"() <{level = 10 : i32, message = "bqd,bkd->bqk"}> : () -> ()
    %cst_15 = arith.constant dense<0.000000e+00> : vector<2x8x8xf32>
    %30 = tpu.matmul %25, %27, %cst_15 {dimension_numbers = #tpu.dot_dimension_numbers<[2], [2], [1], [1], [0, 0, 0, 1, 1, 1], [0], [0]>} : vector<2x8x128xbf16>, vector<2x8x128xbf16>, vector<2x8x8xf32> -> vector<2x8x8xf32>
    "tpu.trace_stop"() : () -> ()
    %31 = tpu.iota {dimensions = array<i32: 1>} : vector<2x8x8xi32>
    %32 = tpu.iota {dimensions = array<i32: 2>} : vector<2x8x8xi32>
    %c0_16 = arith.constant 0 : index
    %c0_17 = arith.constant 0 : index
    %33 = vector.load %arg1[%c0_16, %c0_17] : memref<2x8xi32, #tpu.memory_space<vmem>>, vector<2x8xi32>
    %c0_i32 = arith.constant 0 : i32
    %34 = vector.broadcast %c0_i32 : i32 to vector<2x8xi32>
    %35 = arith.cmpi sgt, %33, %34 : vector<2x8xi32>
    %36 = vector.shape_cast %35 : vector<2x8xi1> to vector<2x1x8xi1>
    %37 = arith.cmpi sle, %32, %31 : vector<2x8x8xi32>
    %38 = vector.broadcast %36 : vector<2x1x8xi1> to vector<2x8x8xi1>
    %39 = arith.andi %37, %38 : vector<2x8x8xi1>
    %cst_18 = arith.constant -1.000000e+30 : f32
    %40 = vector.broadcast %cst_18 : f32 to vector<2x8x8xf32>
    %41 = arith.select %39, %30, %40 : vector<2x8x8xi1>, vector<2x8x8xf32>
    %cst_19 = arith.constant dense<0xFF800000> : vector<2x8xf32>
    %42 = vector.multi_reduction <maximumf>, %41, %cst_19 [2] : vector<2x8x8xf32> to vector<2x8xf32>
    %43 = vector.shape_cast %42 : vector<2x8xf32> to vector<2x8x1xf32>
    %44 = vector.broadcast %43 : vector<2x8x1xf32> to vector<2x8x8xf32>
    %45 = arith.subf %41, %44 : vector<2x8x8xf32>
    %46 = math.exp %45 : vector<2x8x8xf32>
    %cst_20 = arith.constant dense<0.000000e+00> : vector<2x8xf32>
    %47 = vector.multi_reduction <add>, %46, %cst_20 [2] : vector<2x8x8xf32> to vector<2x8xf32>
    %48 = vector.shape_cast %47 : vector<2x8xf32> to vector<2x8x1xf32>
    %49 = tpu.reciprocal %48 {approx = true} : vector<2x8x1xf32> -> vector<2x8x1xf32>
    %50 = vector.broadcast %49 : vector<2x8x1xf32> to vector<2x8x8xf32>
    %51 = arith.mulf %46, %50 : vector<2x8x8xf32>
    %52 = arith.truncf %51 : vector<2x8x8xf32> to vector<2x8x8xbf16>
    "tpu.trace_start"() <{level = 10 : i32, message = "bqk,bkd->bqd"}> : () -> ()
    %cst_21 = arith.constant dense<0.000000e+00> : vector<2x8x128xf32>
    %53 = tpu.matmul %52, %29, %cst_21 {dimension_numbers = #tpu.dot_dimension_numbers<[2], [1], [1], [2], [0, 0, 0, 1, 1, 2], [0], [0]>} : vector<2x8x8xbf16>, vector<2x8x128xbf16>, vector<2x8x128xf32> -> vector<2x8x128xf32>
    "tpu.trace_stop"() : () -> ()
    %54 = vector.shape_cast %53 : vector<2x8x128xf32> to vector<16x128xf32>
    %55 = arith.truncf %54 : vector<16x128xf32> to vector<16x128xbf16>
    %c0_22 = arith.constant 0 : index
    %c0_23 = arith.constant 0 : index
    %56 = vector.load %arg5[%c0_22, %c0_23] : memref<128x128xbf16, #tpu.memory_space<vmem>>, vector<128x128xbf16>
    %cst_24 = arith.constant dense<0.000000e+00> : vector<16x128xf32>
    %57 = tpu.matmul %55, %56, %cst_24 {dimension_numbers = #tpu.dot_dimension_numbers<[1], [0], [0], [1], [0, 0, 1, 1], [], []>} : vector<16x128xbf16>, vector<128x128xbf16>, vector<16x128xf32> -> vector<16x128xf32>
    %58 = arith.addf %2, %57 : vector<16x128xf32>
    %59 = arith.mulf %58, %58 : vector<16x128xf32>
    %cst_25 = arith.constant dense<0.000000e+00> : vector<16xf32>
    %60 = vector.multi_reduction <add>, %59, %cst_25 [1] : vector<16x128xf32> to vector<16xf32>
    %61 = vector.shape_cast %60 : vector<16xf32> to vector<16x1xf32>
    %cst_26 = arith.constant 1.280000e+02 : f32
    %62 = vector.broadcast %cst_26 : f32 to vector<16x1xf32>
    %63 = arith.divf %61, %62 : vector<16x1xf32>
    %cst_27 = arith.constant 9.99999997E-7 : f32
    %64 = vector.broadcast %cst_27 : f32 to vector<16x1xf32>
    %65 = arith.addf %63, %64 : vector<16x1xf32>
    %66 = math.rsqrt %65 : vector<16x1xf32>
    %67 = vector.broadcast %66 : vector<16x1xf32> to vector<16x128xf32>
    %68 = arith.mulf %58, %67 : vector<16x128xf32>
    %c0_28 = arith.constant 0 : index
    %c0_29 = arith.constant 0 : index
    %69 = vector.load %arg9[%c0_28, %c0_29] : memref<1x128xbf16, #tpu.memory_space<vmem>>, vector<1x128xbf16>
    %70 = arith.extf %69 : vector<1x128xbf16> to vector<1x128xf32>
    %71 = vector.broadcast %70 : vector<1x128xf32> to vector<16x128xf32>
    %72 = arith.mulf %68, %71 : vector<16x128xf32>
    %73 = arith.truncf %72 : vector<16x128xf32> to vector<16x128xbf16>
    %c0_30 = arith.constant 0 : index
    %c0_31 = arith.constant 0 : index
    %74 = vector.load %arg6[%c0_30, %c0_31] : memref<128x256xbf16, #tpu.memory_space<vmem>>, vector<128x256xbf16>
    %cst_32 = arith.constant dense<0.000000e+00> : vector<16x256xf32>
    %75 = tpu.matmul %73, %74, %cst_32 {dimension_numbers = #tpu.dot_dimension_numbers<[1], [0], [0], [1], [0, 0, 1, 1], [], []>} : vector<16x128xbf16>, vector<128x256xbf16>, vector<16x256xf32> -> vector<16x256xf32>
    %76 = arith.mulf %75, %75 : vector<16x256xf32>
    %77 = arith.mulf %75, %76 : vector<16x256xf32>
    %cst_33 = arith.constant 4.471500e-02 : f32
    %78 = vector.broadcast %cst_33 : f32 to vector<16x256xf32>
    %79 = arith.mulf %78, %77 : vector<16x256xf32>
    %80 = arith.addf %75, %79 : vector<16x256xf32>
    %cst_34 = arith.constant 0.797884583 : f32
    %81 = vector.broadcast %cst_34 : f32 to vector<16x256xf32>
    %82 = arith.mulf %81, %80 : vector<16x256xf32>
    %83 = math.tanh %82 : vector<16x256xf32>
    %cst_35 = arith.constant 1.000000e+00 : f32
    %84 = vector.broadcast %cst_35 : f32 to vector<16x256xf32>
    %85 = arith.addf %84, %83 : vector<16x256xf32>
    %cst_36 = arith.constant 5.000000e-01 : f32
    %86 = vector.broadcast %cst_36 : f32 to vector<16x256xf32>
    %87 = arith.mulf %86, %85 : vector<16x256xf32>
    %88 = arith.mulf %75, %87 : vector<16x256xf32>
    %89 = arith.truncf %88 : vector<16x256xf32> to vector<16x256xbf16>
    %c0_37 = arith.constant 0 : index
    %c0_38 = arith.constant 0 : index
    %90 = vector.load %arg7[%c0_37, %c0_38] : memref<256x128xbf16, #tpu.memory_space<vmem>>, vector<256x128xbf16>
    %cst_39 = arith.constant dense<0.000000e+00> : vector<16x128xf32>
    %91 = tpu.matmul %89, %90, %cst_39 {dimension_numbers = #tpu.dot_dimension_numbers<[1], [0], [0], [1], [0, 0, 1, 1], [], []>} : vector<16x256xbf16>, vector<256x128xbf16>, vector<16x128xf32> -> vector<16x128xf32>
    %92 = arith.addf %58, %91 : vector<16x128xf32>
    %93 = arith.truncf %92 : vector<16x128xf32> to vector<16x128xbf16>
    %c0_40 = arith.constant 0 : index
    %c0_41 = arith.constant 0 : index
    %94 = vector.load %arg10[%c0_40, %c0_41] : memref<128x256xbf16, #tpu.memory_space<vmem>>, vector<128x256xbf16>
    %cst_42 = arith.constant dense<0.000000e+00> : vector<16x256xf32>
    %95 = tpu.matmul %93, %94, %cst_42 {dimension_numbers = #tpu.dot_dimension_numbers<[1], [0], [0], [1], [0, 0, 1, 1], [], []>} : vector<16x128xbf16>, vector<128x256xbf16>, vector<16x256xf32> -> vector<16x256xf32>
    %96 = vector.shape_cast %95 : vector<16x256xf32> to vector<2x8x256xf32>
    %97 = arith.truncf %96 : vector<2x8x256xf32> to vector<2x8x256xbf16>
    %c0_43 = arith.constant 0 : index
    %c0_44 = arith.constant 0 : index
    %c0_45 = arith.constant 0 : index
    %98 = vector.load %arg11[%c0_43, %c0_44, %c0_45] : memref<2x8x256xbf16, #tpu.memory_space<vmem>>, vector<2x8x256xbf16>
    tpu.vector_store %arg11[%c0_43, %c0_44, %c0_45], %97 {strides = array<i32>} : memref<2x8x256xbf16, #tpu.memory_space<vmem>>, vector<2x8x256xbf16>,
    return
  }
}

</mosaic_0001>

<llo_original>
// kernel: pruned_model_forward.2
$region0: #{pruned_model_forward.2}
  #allocation0 [shape = 'u32[]', space=smem, size = 0x4, offset = 0x4, fixed_abs, tag = 'smem constant byte address 0x4 - core index']
  #allocation1 [shape = 'u32[144,128]{1,0:T(1,128)}', space=vmem, size = 0x12000, scoped, tag = 'internal scratch']
  %s0 = inlined_call_operand.vmem [shape: f32[2,8,64], index: 0, kind: input, shape index: {}]
  %s1 = inlined_call_operand.vmem [shape: f32[64,128], index: 1, kind: input, shape index: {}]
  %s2 = inlined_call_operand.vmem [shape: f32[1,128], index: 2, kind: input, shape index: {}]
  %s3 = inlined_call_operand.vmem [shape: f32[2,8], index: 3, kind: output, shape index: {}]
  %s4 = sld [smem:[#allocation0]]
  $region22: #{pruned_model_forward.2} parent=0
    _
  %s6 = ssub.s32 1, %s4
  %s7 = scalar_select 0, %s6, %s4
  // Predicated region
  $region2: #{pruned_model_forward.2} parent=0 // pred_check
    _
  $region3: #{pruned_model_forward.2} parent=0 // pred_check_branch
    %9 = sbr.rel (0) target = $region5
  $region4: #{pruned_model_forward.2} parent=0 // pred_region
    _
  $region5: #{pruned_model_forward.2} parent=0 // pred_fallthru
    _
  // Predicated region
  $region6: #{pruned_model_forward.2} parent=0 // pred_check
    _
  $region7: #{pruned_model_forward.2} parent=0 // pred_check_branch
    %11 = sbr.rel (0) target = $region9
  $region8: #{pruned_model_forward.2} parent=0 // pred_region
    _
  $region9: #{pruned_model_forward.2} parent=0 // pred_fallthru
    _
  // Predicated region
  $region10: #{pruned_model_forward.2} parent=0 // pred_check
    _
  $region11: #{pruned_model_forward.2} parent=0 // pred_check_branch
    %13 = sbr.rel (0) target = $region13
  $region12: #{pruned_model_forward.2} parent=0 // pred_region
    _
  $region13: #{pruned_model_forward.2} parent=0 // pred_fallthru
    _
  %v14 = vld [vmem:[%s0] sm:$0xff]
  %v15 = vld [vmem:[%s0 + $0x8] sm:$0xff]
  %v16 = vld [vmem:[%s1] sm:$0xff]
  %v17 = vld [vmem:[%s1 + $0x8] sm:$0xff]
  %v18 = vld [vmem:[%s1 + $0x10] sm:$0xff]
  %v19 = vld [vmem:[%s1 + $0x18] sm:$0xff]
  %v20 = vld [vmem:[%s1 + $0x20] sm:$0xff]
  %v21 = vld [vmem:[%s1 + $0x28] sm:$0xff]
  %v22 = vld [vmem:[%s1 + $0x30] sm:$0xff]
  %v23 = vld [vmem:[%s1 + $0x38] sm:$0xff]
  %v24 = vld [vmem:[%s2] sm:$0x1]
  %vm25 = vcmask 523264
  %v27 = vsel %vm25, %v14, 0
  %v30 = vsel %vm25, %v15, 0
  %32 = vmatprep.subr.mxu0 0.0
  %33 = vmatpush1.msra.mxu0 %v16
  %34 = vmatprep.subr.mxu0 0.0
  %35 = vmatpush1.msra.mxu0 %v17
  %36 = vmatprep.subr.mxu0 0.0
  %37 = vmatpush1.msra.mxu0 %v18
  %38 = vmatprep.subr.mxu0 0.0
  %39 = vmatpush1.msra.mxu0 %v19
  %40 = vmatprep.subr.mxu0 0.0
  %41 = vmatpush1.msra.mxu0 %v20
  %42 = vmatprep.subr.mxu0 0.0
  %43 = vmatpush1.msra.mxu0 %v21
  %44 = vmatprep.subr.mxu0 0.0
  %45 = vmatpush1.msra.mxu0 %v22
  %46 = vmatprep.subr.mxu0 0.0
  %47 = vmatpush1.msra.mxu0 %v23
  %48 = vmatprep.subr.mxu0 0.0
  %49 = vmatpush1.msra.mxu0 0.0
  %50 = vmatprep.subr.mxu0 0.0
  %51 = vmatpush1.msra.mxu0 0.0
  %52 = vmatprep.subr.mxu0 0.0
  %53 = vmatpush1.msra.mxu0 0.0
  %54 = vmatprep.subr.mxu0 0.0
  %55 = vmatpush1.msra.mxu0 0.0
  %56 = vmatprep.subr.mxu0 0.0
  %57 = vmatpush1.msra.mxu0 0.0
  %58 = vmatprep.subr.mxu0 0.0
  %59 = vmatpush1.msra.mxu0 0.0
  %60 = vmatprep.subr.mxu0 0.0
  %61 = vmatpush1.msra.mxu0 0.0
  %62 = vmatprep.subr.mxu0 0.0
  %63 = vmatpush1.msra.mxu0 0.0
  %64 = vmatprep.subr.mxu0 0.0
  %65 = vmatpush1.msra.mxu0 0.0
  %66 = vmatprep.subr.mxu0 0.0
  %67 = vmatpush1.msra.mxu0 0.0
  %68 = vmatprep.subr.mxu0 0.0
  %69 = vmatpush1.msra.mxu0 0.0
  %70 = vmatprep.subr.mxu0 0.0
  %71 = vmatpush1.msra.mxu0 0.0
  %72 = vmatprep.subr.mxu0 0.0
  %73 = vmatpush1.msra.mxu0 0.0
  %74 = vmatprep.subr.mxu0 0.0
  %75 = vmatpush1.msra.mxu0 0.0
  %76 = vmatprep.subr.mxu0 0.0
  %77 = vmatpush1.msra.mxu0 0.0
  %78 = vmatprep.subr.mxu0 0.0
  %79 = vmatpush1.msra.mxu0 0.0
  %80 = vmatprep.subr.mxu0 0.0
  %81 = vmatpush1.msra.mxu0 0.0
  %82 = vmatprep.subr.mxu0 0.0
  %83 = vmatpush1.msra.mxu0 0.0
  %84 = vmatprep.subr.mxu0 0.0
  %85 = vmatpush1.msra.mxu0 0.0
  %86 = vmatprep.subr.mxu0 0.0
  %87 = vmatpush1.msra.mxu0 0.0
  %88 = vmatprep.subr.mxu0 0.0
  %89 = vmatpush1.msra.mxu0 0.0
  %90 = vmatprep.subr.mxu0 0.0
  %91 = vmatpush1.msra.mxu0 0.0
  %92 = vmatprep.subr.mxu0 0.0
  %93 = vmatpush1.msra.mxu0 0.0
  %94 = vmatprep.subr.mxu0 0.0
  %95 = vmatpush1.msra.mxu0 0.0
  %96 = vmatprep.mubr.f32.mxu0 0.0
  %97 = vmatmul.mubr.f32.gmra.mrb[0].mxu0 %v27
  %v98 = vpop.f32.mrb[0].mxu0
  %v99 = vadd.f32 0.0, %v98
  %v100 = vpop.f32.mrb[0].mxu0
  %101 = vmatprep.mubr.f32.mxu0 0.0
  %102 = vmatmul.mubr.f32.gmra.mrb[0].mxu0 %v30
  %v103 = vpop.f32.mrb[0].mxu0
  %v104 = vadd.f32 0.0, %v103
  %v105 = vpop.f32.mrb[0].mxu0
  %106 = vdwg.mxu0
  %v107 = vtanh.pop %v99
  %v108 = vtanh.pop %v104
  %v110 = vlaneseq
  %v111 = vshrl.u32 %v110, 7
  %v112 = vsub.s32 0, %v111
  %v113 = vrot.slane %v24, %v112
  %v115 = vmul.f32 %v107, %v113
  %v116 = vmul.f32 %v108, %v113
  %117 = vadd.xlane.f32.xlu0 %v115
  %v118 = vpop.xlane.xlu0 %117
  %119 = vadd.xlane.f32.xlu0 %v116
  %v120 = vpop.xlane.xlu0 %119
  %v123 = vlaneseq
  %v124 = vand.u32 %v123, 127
  %v125 = vlaneseq
  %v126 = vshrl.u32 %v125, 7
  %v127 = vsub.s32 %v124, %v126
  %v128 = vrot.slane %v118, %v127
  %v129 = vlaneseq
  %v130 = vshrl.u32 %v129, 7
  %v131 = vsub.s32 %v124, %v130
  %v132 = vrot.slane %v120, %v131
  %vm133 = vcmask 1041409
  %v134 = vsel %vm133, %v132, %v128
  %vm136 = vcmask 58368
  %137 = vst.msk [vmem:[%s3] sm:$0x3] %vm136, %v134
  // Predicated region
  $region14: #{pruned_model_forward.2} parent=0 // pred_check
    _
  $region15: #{pruned_model_forward.2} parent=0 // pred_check_branch
    %139 = sbr.rel (0) target = $region17
  $region16: #{pruned_model_forward.2} parent=0 // pred_region
    _
  $region17: #{pruned_model_forward.2} parent=0 // pred_fallthru
    _
  // Predicated region
  $region18: #{pruned_model_forward.2} parent=0 // pred_check
    _
  $region19: #{pruned_model_forward.2} parent=0 // pred_check_branch
    %141 = sbr.rel (0) target = $region21
  $region20: #{pruned_model_forward.2} parent=0 // pred_region
    _
  $region21: #{pruned_model_forward.2} parent=0 // pred_fallthru
    _

// kernel: pruned_model_forward.3
$region0: #{pruned_model_forward.3}
  #allocation0 [shape = 'u32[]', space=smem, size = 0x4, offset = 0x4, fixed_abs, tag = 'smem constant byte address 0x4 - core index']
  #allocation1 [shape = 'u32[144,128]{1,0:T(1,128)}', space=vmem, size = 0x12000, scoped, tag = 'internal scratch']
  %s0 = inlined_call_operand.vmem [shape: bf16[2,8,128], index: 0, kind: input, shape index: {}]
  %s1 = inlined_call_operand.vmem [shape: s32[2,8], index: 1, kind: input, shape index: {}]
  %s2 = inlined_call_operand.vmem [shape: bf16[128,128], index: 2, kind: input, shape index: {}]
  %s3 = inlined_call_operand.vmem [shape: bf16[128,128], index: 3, kind: input, shape index: {}]
  %s4 = inlined_call_operand.vmem [shape: bf16[128,128], index: 4, kind: input, shape index: {}]
  %s5 = inlined_call_operand.vmem [shape: bf16[128,128], index: 5, kind: input, shape index: {}]
  %s6 = inlined_call_operand.vmem [shape: bf16[128,256], index: 6, kind: input, shape index: {}]
  %s7 = inlined_call_operand.vmem [shape: bf16[256,128], index: 7, kind: input, shape index: {}]
  %s8 = inlined_call_operand.vmem [shape: bf16[1,128], index: 8, kind: input, shape index: {}]
  %s9 = inlined_call_operand.vmem [shape: bf16[1,128], index: 9, kind: input, shape index: {}]
  %s10 = inlined_call_operand.vmem [shape: bf16[128,256], index: 10, kind: input, shape index: {}]
  %s11 = inlined_call_operand.vmem [shape: bf16[2,8,256], index: 11, kind: output, shape index: {}]
  %s12 = sld [smem:[#allocation0]]
  $region54: #{pruned_model_forward.3} parent=0
    _
  %s14 = ssub.s32 1, %s12
  %s15 = scalar_select 0, %s14, %s12
  // Predicated region
  $region2: #{pruned_model_forward.3} parent=0 // pred_check
    _
  $region3: #{pruned_model_forward.3} parent=0 // pred_check_branch
    %17 = sbr.rel (0) target = $region5
  $region4: #{pruned_model_forward.3} parent=0 // pred_region
    _
  $region5: #{pruned_model_forward.3} parent=0 // pred_fallthru
    _
  // Predicated region
  $region6: #{pruned_model_forward.3} parent=0 // pred_check
    _
  $region7: #{pruned_model_forward.3} parent=0 // pred_check_branch
    %19 = sbr.rel (0) target = $region9
  $region8: #{pruned_model_forward.3} parent=0 // pred_region
    _
  $region9: #{pruned_model_forward.3} parent=0 // pred_fallthru
    _
  // Predicated region
  $region10: #{pruned_model_forward.3} parent=0 // pred_check
    _
  $region11: #{pruned_model_forward.3} parent=0 // pred_check_branch
    %21 = sbr.rel (0) target = $region13
  $region12: #{pruned_model_forward.3} parent=0 // pred_region
    _
  $region13: #{pruned_model_forward.3} parent=0 // pred_fallthru
    _
  // Predicated region
  $region14: #{pruned_model_forward.3} parent=0 // pred_check
    _
  $region15: #{pruned_model_forward.3} parent=0 // pred_check_branch
    %23 = sbr.rel (0) target = $region17
  $region16: #{pruned_model_forward.3} parent=0 // pred_region
    _
  $region17: #{pruned_model_forward.3} parent=0 // pred_fallthru
    _
  // Predicated region
  $region18: #{pruned_model_forward.3} parent=0 // pred_check
    _
  $region19: #{pruned_model_forward.3} parent=0 // pred_check_branch
    %25 = sbr.rel (0) target = $region21
  $region20: #{pruned_model_forward.3} parent=0 // pred_region
    _
  $region21: #{pruned_model_forward.3} parent=0 // pred_fallthru
    _
  // Predicated region
  $region22: #{pruned_model_forward.3} parent=0 // pred_check
    _
  $region23: #{pruned_model_forward.3} parent=0 // pred_check_branch
    %27 = sbr.rel (0) target = $region25
  $region24: #{pruned_model_forward.3} parent=0 // pred_region
    _
  $region25: #{pruned_model_forward.3} parent=0 // pred_fallthru
    _
  // Predicated region
  $region26: #{pruned_model_forward.3} parent=0 // pred_check
    _
  $region27: #{pruned_model_forward.3} parent=0 // pred_check_branch
    %29 = sbr.rel (0) target = $region29
  $region28: #{pruned_model_forward.3} parent=0 // pred_region
    _
  $region29: #{pruned_model_forward.3} parent=0 // pred_fallthru
    _
  // Predicated region
  $region30: #{pruned_model_forward.3} parent=0 // pred_check
    _
  $region31: #{pruned_model_forward.3} parent=0 // pred_check_branch
    %31 = sbr.rel (0) target = $region33
  $region32: #{pruned_model_forward.3} parent=0 // pred_region
    _
  $region33: #{pruned_model_forward.3} parent=0 // pred_fallthru
    _
  // Predicated region
  $region34: #{pruned_model_forward.3} parent=0 // pred_check
    _
  $region35: #{pruned_model_forward.3} parent=0 // pred_check_branch
    %33 = sbr.rel (0) target = $region37
  $region36: #{pruned_model_forward.3} parent=0 // pred_region
    _
  $region37: #{pruned_model_forward.3} parent=0 // pred_fallthru
    _
  // Predicated region
  $region38: #{pruned_model_forward.3} parent=0 // pred_check
    _
  $region39: #{pruned_model_forward.3} parent=0 // pred_check_branch
    %35 = sbr.rel (0) target = $region41
  $region40: #{pruned_model_forward.3} parent=0 // pred_region
    _
  $region41: #{pruned_model_forward.3} parent=0 // pred_fallthru
    _
  // Predicated region
  $region42: #{pruned_model_forward.3} parent=0 // pred_check
    _
  $region43: #{pruned_model_forward.3} parent=0 // pred_check_branch
    %37 = sbr.rel (0) target = $region45
  $region44: #{pruned_model_forward.3} parent=0 // pred_region
    _
  $region45: #{pruned_model_forward.3} parent=0 // pred_fallthru
    _
  %v39 = vld [vmem:[%s0] sm:$0xf]
  %v40 = vld [vmem:[%s0 + $0x4] sm:$0xf]
  %v41 = vunpack.c.l.bf16 %v39
  %v42 = vunpack.c.l.bf16 %v40
  %v43 = vmul.f32 %v41, %v41
  %v44 = vmul.f32 %v42, %v42
  %45 = vadd.xlane.f32.xlu0 %v43
  %v46 = vpop.xlane.xlu0 %45
  %47 = vadd.xlane.f32.xlu0 %v44
  %v48 = vpop.xlane.xlu0 %47
  %v49 = vrcp.pop 128.0
  %v50 = vmul.f32 %v46, %v49
  %v51 = vmul.f32 %v48, %v49
  %v52 = vadd.f32 %v50, 1e-06
  %v53 = vadd.f32 %v51, 1e-06
  %v54 = vrsqrt.pop %v52
  %v55 = vrsqrt.pop %v53
  %v56 = vmul.f32 %v41, %v54
  %v57 = vmul.f32 %v42, %v55
  %v58 = vld [vmem:[%s8] sm:$0x1]
  %v59 = vunpack.c.l.bf16 %v58
  %v60 = vlaneseq
  %v61 = vshrl.u32 %v60, 7
  %v62 = vsub.s32 0, %v61
  %v63 = vrot.slane %v59, %v62
  %v64 = vmul.f32 %v56, %v63
  %v65 = vmul.f32 %v57, %v63
  %v66 = vpack.c.bf16 %v65, %v64
  %v67 = vld [vmem:[%s2] sm:$0xf]
  %v68 = vld [vmem:[%s2 + $0x4] sm:$0xf]
  %v69 = vld [vmem:[%s2 + $0x8] sm:$0xf]
  %v70 = vld [vmem:[%s2 + $0xc] sm:$0xf]
  %v71 = vld [vmem:[%s2 + $0x10] sm:$0xf]
  %v72 = vld [vmem:[%s2 + $0x14] sm:$0xf]
  %v73 = vld [vmem:[%s2 + $0x18] sm:$0xf]
  %v74 = vld [vmem:[%s2 + $0x1c] sm:$0xf]
  %v75 = vld [vmem:[%s2 + $0x20] sm:$0xf]
  %v76 = vld [vmem:[%s2 + $0x24] sm:$0xf]
  %v77 = vld [vmem:[%s2 + $0x28] sm:$0xf]
  %v78 = vld [vmem:[%s2 + $0x2c] sm:$0xf]
  %v79 = vld [vmem:[%s2 + $0x30] sm:$0xf]
  %v80 = vld [vmem:[%s2 + $0x34] sm:$0xf]
  %v81 = vld [vmem:[%s2 + $0x38] sm:$0xf]
  %v82 = vld [vmem:[%s2 + $0x3c] sm:$0xf]
  %v99 = vunpack.c.l.b16 %v67
  %v100 = vunpack.c.l.b16 %v68
  %v101 = vunpack.c.l.b16 %v69
  %v102 = vunpack.c.l.b16 %v70
  %v103 = vunpack.c.l.b16 %v71
  %v104 = vunpack.c.l.b16 %v72
  %v105 = vunpack.c.l.b16 %v73
  %v106 = vunpack.c.l.b16 %v74
  %v107 = vunpack.c.l.b16 %v75
  %v108 = vunpack.c.l.b16 %v76
  %v109 = vunpack.c.l.b16 %v77
  %v110 = vunpack.c.l.b16 %v78
  %v111 = vunpack.c.l.b16 %v79
  %v112 = vunpack.c.l.b16 %v80
  %v113 = vunpack.c.l.b16 %v81
  %v114 = vunpack.c.l.b16 %v82
  %v115 = vpack.c.b16 %v100, %v99
  %v116 = vpack.c.b16 %v102, %v101
  %v117 = vpack.c.b16 %v104, %v103
  %v118 = vpack.c.b16 %v106, %v105
  %v119 = vpack.c.b16 %v108, %v107
  %v120 = vpack.c.b16 %v110, %v109
  %v121 = vpack.c.b16 %v112, %v111
  %v122 = vpack.c.b16 %v114, %v113
  %131 = vmatprep.subr.bf16.mxu0 0
  %132 = vmatpush1.bf16.msra.mxu0 %v115
  %133 = vmatprep.subr.bf16.mxu0 0
  %134 = vmatpush1.bf16.msra.mxu0 %v116
  %135 = vmatprep.subr.bf16.mxu0 0
  %136 = vmatpush1.bf16.msra.mxu0 %v117
  %137 = vmatprep.subr.bf16.mxu0 0
  %138 = vmatpush1.bf16.msra.mxu0 %v118
  %139 = vmatprep.subr.bf16.mxu0 0
  %140 = vmatpush1.bf16.msra.mxu0 %v119
  %141 = vmatprep.subr.bf16.mxu0 0
  %142 = vmatpush1.bf16.msra.mxu0 %v120
  %143 = vmatprep.subr.bf16.mxu0 0
  %144 = vmatpush1.bf16.msra.mxu0 %v121
  %145 = vmatprep.subr.bf16.mxu0 0
  %146 = vmatpush1.bf16.msra.mxu0 %v122
  %147 = vmatprep.subr.bf16.mxu0 0
  %148 = vmatpush1.bf16.msra.mxu0 0
  %149 = vmatprep.subr.bf16.mxu0 0
  %150 = vmatpush1.bf16.msra.mxu0 0
  %151 = vmatprep.subr.bf16.mxu0 0
  %152 = vmatpush1.bf16.msra.mxu0 0
  %153 = vmatprep.subr.bf16.mxu0 0
  %154 = vmatpush1.bf16.msra.mxu0 0
  %155 = vmatprep.subr.bf16.mxu0 0
  %156 = vmatpush1.bf16.msra.mxu0 0
  %157 = vmatprep.subr.bf16.mxu0 0
  %158 = vmatpush1.bf16.msra.mxu0 0
  %159 = vmatprep.subr.bf16.mxu0 0
  %160 = vmatpush1.bf16.msra.mxu0 0
  %161 = vmatprep.subr.bf16.mxu0 0
  %162 = vmatpush1.bf16.msra.mxu0 0
  %163 = vmatprep.mubr.bf16.mxu0 0
  %164 = vmatmul.mubr.bf16.gmra.mrb[0].mxu0 %v66
  %v165 = vpop.f32.mrb[0].mxu0
  %v166 = vadd.f32 0.0, %v165
  %v167 = vpop.f32.mrb[0].mxu0
  %v168 = vpop.f32.mrb[0].mxu0
  %v169 = vadd.f32 0.0, %v168
  %v170 = vpop.f32.mrb[0].mxu0
  %171 = vdwg.mxu0
  %v172 = vld [vmem:[%s3] sm:$0xf]
  %v173 = vld [vmem:[%s3 + $0x4] sm:$0xf]
  %v174 = vld [vmem:[%s3 + $0x8] sm:$0xf]
  %v175 = vld [vmem:[%s3 + $0xc] sm:$0xf]
  %v176 = vld [vmem:[%s3 + $0x10] sm:$0xf]
  %v177 = vld [vmem:[%s3 + $0x14] sm:$0xf]
  %v178 = vld [vmem:[%s3 + $0x18] sm:$0xf]
  %v179 = vld [vmem:[%s3 + $0x1c] sm:$0xf]
  %v180 = vld [vmem:[%s3 + $0x20] sm:$0xf]
  %v181 = vld [vmem:[%s3 + $0x24] sm:$0xf]
  %v182 = vld [vmem:[%s3 + $0x28] sm:$0xf]
  %v183 = vld [vmem:[%s3 + $0x2c] sm:$0xf]
  %v184 = vld [vmem:[%s3 + $0x30] sm:$0xf]
  %v185 = vld [vmem:[%s3 + $0x34] sm:$0xf]
  %v186 = vld [vmem:[%s3 + $0x38] sm:$0xf]
  %v187 = vld [vmem:[%s3 + $0x3c] sm:$0xf]
  %v204 = vunpack.c.l.b16 %v172
  %v205 = vunpack.c.l.b16 %v173
  %v206 = vunpack.c.l.b16 %v174
  %v207 = vunpack.c.l.b16 %v175
  %v208 = vunpack.c.l.b16 %v176
  %v209 = vunpack.c.l.b16 %v177
  %v210 = vunpack.c.l.b16 %v178
  %v211 = vunpack.c.l.b16 %v179
  %v212 = vunpack.c.l.b16 %v180
  %v213 = vunpack.c.l.b16 %v181
  %v214 = vunpack.c.l.b16 %v182
  %v215 = vunpack.c.l.b16 %v183
  %v216 = vunpack.c.l.b16 %v184
  %v217 = vunpack.c.l.b16 %v185
  %v218 = vunpack.c.l.b16 %v186
  %v219 = vunpack.c.l.b16 %v187
  %v220 = vpack.c.b16 %v205, %v204
  %v221 = vpack.c.b16 %v207, %v206
  %v222 = vpack.c.b16 %v209, %v208
  %v223 = vpack.c.b16 %v211, %v210
  %v224 = vpack.c.b16 %v213, %v212
  %v225 = vpack.c.b16 %v215, %v214
  %v226 = vpack.c.b16 %v217, %v216
  %v227 = vpack.c.b16 %v219, %v218
  %236 = vmatprep.subr.bf16.mxu0 0
  %237 = vmatpush1.bf16.msra.mxu0 %v220
  %238 = vmatprep.subr.bf16.mxu0 0
  %239 = vmatpush1.bf16.msra.mxu0 %v221
  %240 = vmatprep.subr.bf16.mxu0 0
  %241 = vmatpush1.bf16.msra.mxu0 %v222
  %242 = vmatprep.subr.bf16.mxu0 0
  %243 = vmatpush1.bf16.msra.mxu0 %v223
  %244 = vmatprep.subr.bf16.mxu0 0
  %245 = vmatpush1.bf16.msra.mxu0 %v224
  %246 = vmatprep.subr.bf16.mxu0 0
  %247 = vmatpush1.bf16.msra.mxu0 %v225
  %248 = vmatprep.subr.bf16.mxu0 0
  %249 = vmatpush1.bf16.msra.mxu0 %v226
  %250 = vmatprep.subr.bf16.mxu0 0
  %251 = vmatpush1.bf16.msra.mxu0 %v227
  %252 = vmatprep.subr.bf16.mxu0 0
  %253 = vmatpush1.bf16.msra.mxu0 0
  %254 = vmatprep.subr.bf16.mxu0 0
  %255 = vmatpush1.bf16.msra.mxu0 0
  %256 = vmatprep.subr.bf16.mxu0 0
  %257 = vmatpush1.bf16.msra.mxu0 0
  %258 = vmatprep.subr.bf16.mxu0 0
  %259 = vmatpush1.bf16.msra.mxu0 0
  %260 = vmatprep.subr.bf16.mxu0 0
  %261 = vmatpush1.bf16.msra.mxu0 0
  %262 = vmatprep.subr.bf16.mxu0 0
  %263 = vmatpush1.bf16.msra.mxu0 0
  %264 = vmatprep.subr.bf16.mxu0 0
  %265 = vmatpush1.bf16.msra.mxu0 0
  %266 = vmatprep.subr.bf16.mxu0 0
  %267 = vmatpush1.bf16.msra.mxu0 0
  %268 = vmatprep.mubr.bf16.mxu0 0
  %269 = vmatmul.mubr.bf16.gmra.mrb[0].mxu0 %v66
  %v270 = vpop.f32.mrb[0].mxu0
  %v271 = vadd.f32 0.0, %v270
  %v272 = vpop.f32.mrb[0].mxu0
  %v273 = vpop.f32.mrb[0].mxu0
  %v274 = vadd.f32 0.0, %v273
  %v275 = vpop.f32.mrb[0].mxu0
  %276 = vdwg.mxu0
  %v277 = vld [vmem:[%s4] sm:$0xf]
  %v278 = vld [vmem:[%s4 + $0x4] sm:$0xf]
  %v279 = vld [vmem:[%s4 + $0x8] sm:$0xf]
  %v280 = vld [vmem:[%s4 + $0xc] sm:$0xf]
  %v281 = vld [vmem:[%s4 + $0x10] sm:$0xf]
  %v282 = vld [vmem:[%s4 + $0x14] sm:$0xf]
  %v283 = vld [vmem:[%s4 + $0x18] sm:$0xf]
  %v284 = vld [vmem:[%s4 + $0x1c] sm:$0xf]
  %v285 = vld [vmem:[%s4 + $0x20] sm:$0xf]
  %v286 = vld [vmem:[%s4 + $0x24] sm:$0xf]
  %v287 = vld [vmem:[%s4 + $0x28] sm:$0xf]
  %v288 = vld [vmem:[%s4 + $0x2c] sm:$0xf]
  %v289 = vld [vmem:[%s4 + $0x30] sm:$0xf]
  %v290 = vld [vmem:[%s4 + $0x34] sm:$0xf]
  %v291 = vld [vmem:[%s4 + $0x38] sm:$0xf]
  %v292 = vld [vmem:[%s4 + $0x3c] sm:$0xf]
  %v309 = vunpack.c.l.b16 %v277
  %v310 = vunpack.c.l.b16 %v278
  %v311 = vunpack.c.l.b16 %v279
  %v312 = vunpack.c.l.b16 %v280
  %v313 = vunpack.c.l.b16 %v281
  %v314 = vunpack.c.l.b16 %v282
  %v315 = vunpack.c.l.b16 %v283
  %v316 = vunpack.c.l.b16 %v284
  %v317 = vunpack.c.l.b16 %v285
  %v318 = vunpack.c.l.b16 %v286
  %v319 = vunpack.c.l.b16 %v287
  %v320 = vunpack.c.l.b16 %v288
  %v321 = vunpack.c.l.b16 %v289
  %v322 = vunpack.c.l.b16 %v290
  %v323 = vunpack.c.l.b16 %v291
  %v324 = vunpack.c.l.b16 %v292
  %v325 = vpack.c.b16 %v310, %v309
  %v326 = vpack.c.b16 %v312, %v311
  %v327 = vpack.c.b16 %v314, %v313
  %v328 = vpack.c.b16 %v316, %v315
  %v329 = vpack.c.b16 %v318, %v317
  %v330 = vpack.c.b16 %v320, %v319
  %v331 = vpack.c.b16 %v322, %v321
  %v332 = vpack.c.b16 %v324, %v323
  %341 = vmatprep.subr.bf16.mxu0 0
  %342 = vmatpush1.bf16.msra.mxu0 %v325
  %343 = vmatprep.subr.bf16.mxu0 0
  %344 = vmatpush1.bf16.msra.mxu0 %v326
  %345 = vmatprep.subr.bf16.mxu0 0
  %346 = vmatpush1.bf16.msra.mxu0 %v327
  %347 = vmatprep.subr.bf16.mxu0 0
  %348 = vmatpush1.bf16.msra.mxu0 %v328
  %349 = vmatprep.subr.bf16.mxu0 0
  %350 = vmatpush1.bf16.msra.mxu0 %v329
  %351 = vmatprep.subr.bf16.mxu0 0
  %352 = vmatpush1.bf16.msra.mxu0 %v330
  %353 = vmatprep.subr.bf16.mxu0 0
  %354 = vmatpush1.bf16.msra.mxu0 %v331
  %355 = vmatprep.subr.bf16.mxu0 0
  %356 = vmatpush1.bf16.msra.mxu0 %v332
  %357 = vmatprep.subr.bf16.mxu0 0
  %358 = vmatpush1.bf16.msra.mxu0 0
  %359 = vmatprep.subr.bf16.mxu0 0
  %360 = vmatpush1.bf16.msra.mxu0 0
  %361 = vmatprep.subr.bf16.mxu0 0
  %362 = vmatpush1.bf16.msra.mxu0 0
  %363 = vmatprep.subr.bf16.mxu0 0
  %364 = vmatpush1.bf16.msra.mxu0 0
  %365 = vmatprep.subr.bf16.mxu0 0
  %366 = vmatpush1.bf16.msra.mxu0 0
  %367 = vmatprep.subr.bf16.mxu0 0
  %368 = vmatpush1.bf16.msra.mxu0 0
  %369 = vmatprep.subr.bf16.mxu0 0
  %370 = vmatpush1.bf16.msra.mxu0 0
  %371 = vmatprep.subr.bf16.mxu0 0
  %372 = vmatpush1.bf16.msra.mxu0 0
  %373 = vmatprep.mubr.bf16.mxu0 0
  %374 = vmatmul.mubr.bf16.gmra.mrb[0].mxu0 %v66
  %v375 = vpop.f32.mrb[0].mxu0
  %v376 = vadd.f32 0.0, %v375
  %v377 = vpop.f32.mrb[0].mxu0
  %v378 = vpop.f32.mrb[0].mxu0
  %v379 = vadd.f32 0.0, %v378
  %v380 = vpop.f32.mrb[0].mxu0
  %381 = vdwg.mxu0
  %v382 = vpack.c.bf16 %v166, %v166
  %v383 = vpack.c.bf16 %v169, %v169
  %v384 = vpack.c.bf16 %v271, %v271
  %v385 = vpack.c.bf16 %v274, %v274
  %v386 = vpack.c.bf16 %v376, %v376
  %v387 = vpack.c.bf16 %v379, %v379
  %388 = vmatprep.subr.bf16.mxu0 0
  %389 = vmatpush1.bf16.xpose.msra.mxu0 %v384
  %390 = vmatprep.subr.bf16.mxu0 0
  %391 = vmatpush1.bf16.xpose.msra.mxu0 0
  %392 = vmatprep.subr.bf16.mxu0 0
  %393 = vmatpush1.bf16.xpose.msra.mxu0 0
  %394 = vmatprep.subr.bf16.mxu0 0
  %395 = vmatpush1.bf16.xpose.msra.mxu0 0
  %396 = vmatprep.subr.bf16.mxu0 0
  %397 = vmatpush1.bf16.xpose.msra.mxu0 0
  %398 = vmatprep.subr.bf16.mxu0 0
  %399 = vmatpush1.bf16.xpose.msra.mxu0 0
  %400 = vmatprep.subr.bf16.mxu0 0
  %401 = vmatpush1.bf16.xpose.msra.mxu0 0
  %402 = vmatprep.subr.bf16.mxu0 0
  %403 = vmatpush1.bf16.xpose.msra.mxu0 0
  %404 = vmatprep.subr.bf16.mxu0 0
  %405 = vmatpush1.bf16.xpose.msra.mxu0 0
  %406 = vmatprep.subr.bf16.mxu0 0
  %407 = vmatpush1.bf16.xpose.msra.mxu0 0
  %408 = vmatprep.subr.bf16.mxu0 0
  %409 = vmatpush1.bf16.xpose.msra.mxu0 0
  %410 = vmatprep.subr.bf16.mxu0 0
  %411 = vmatpush1.bf16.xpose.msra.mxu0 0
  %412 = vmatprep.subr.bf16.mxu0 0
  %413 = vmatpush1.bf16.xpose.msra.mxu0 0
  %414 = vmatprep.subr.bf16.mxu0 0
  %415 = vmatpush1.bf16.xpose.msra.mxu0 0
  %416 = vmatprep.subr.bf16.mxu0 0
  %417 = vmatpush1.bf16.xpose.msra.mxu0 0
  %418 = vmatprep.subr.bf16.mxu0 0
  %419 = vmatpush1.bf16.xpose.msra.mxu0 0
  %420 = vmatprep.mubr.bf16.mxu0 0
  %421 = vmatmul.mubr.bf16.gmra.mrb[0].mxu0 %v382
  %v422 = vpop.f32.mrb[0].mxu0
  %v423 = vadd.f32 0.0, %v422
  %v424 = vpop.f32.mrb[0].mxu0
  %v425 = vpop.f32.mrb[0].mxu0
  %v426 = vpop.f32.mrb[0].mxu0
  %427 = vdwg.mxu0
  %428 = vmatprep.subr.bf16.mxu0 0
  %429 = vmatpush1.bf16.xpose.msra.mxu0 %v385
  %430 = vmatprep.subr.bf16.mxu0 0
  %431 = vmatpush1.bf16.xpose.msra.mxu0 0
  %432 = vmatprep.subr.bf16.mxu0 0
  %433 = vmatpush1.bf16.xpose.msra.mxu0 0
  %434 = vmatprep.subr.bf16.mxu0 0
  %435 = vmatpush1.bf16.xpose.msra.mxu0 0
  %436 = vmatprep.subr.bf16.mxu0 0
  %437 = vmatpush1.bf16.xpose.msra.mxu0 0
  %438 = vmatprep.subr.bf16.mxu0 0
  %439 = vmatpush1.bf16.xpose.msra.mxu0 0
  %440 = vmatprep.subr.bf16.mxu0 0
  %441 = vmatpush1.bf16.xpose.msra.mxu0 0
  %442 = vmatprep.subr.bf16.mxu0 0
  %443 = vmatpush1.bf16.xpose.msra.mxu0 0
  %444 = vmatprep.subr.bf16.mxu0 0
  %445 = vmatpush1.bf16.xpose.msra.mxu0 0
  %446 = vmatprep.subr.bf16.mxu0 0
  %447 = vmatpush1.bf16.xpose.msra.mxu0 0
  %448 = vmatprep.subr.bf16.mxu0 0
  %449 = vmatpush1.bf16.xpose.msra.mxu0 0
  %450 = vmatprep.subr.bf16.mxu0 0
  %451 = vmatpush1.bf16.xpose.msra.mxu0 0
  %452 = vmatprep.subr.bf16.mxu0 0
  %453 = vmatpush1.bf16.xpose.msra.mxu0 0
  %454 = vmatprep.subr.bf16.mxu0 0
  %455 = vmatpush1.bf16.xpose.msra.mxu0 0
  %456 = vmatprep.subr.bf16.mxu0 0
  %457 = vmatpush1.bf16.xpose.msra.mxu0 0
  %458 = vmatprep.subr.bf16.mxu0 0
  %459 = vmatpush1.bf16.xpose.msra.mxu0 0
  %460 = vmatprep.mubr.bf16.mxu0 0
  %461 = vmatmul.mubr.bf16.gmra.mrb[0].mxu0 %v383
  %v462 = vpop.f32.mrb[0].mxu0
  %v463 = vadd.f32 0.0, %v462
  %v464 = vpop.f32.mrb[0].mxu0
  %v465 = vpop.f32.mrb[0].mxu0
  %v466 = vpop.f32.mrb[0].mxu0
  %467 = vdwg.mxu0
  %v468 = vlaneseq
  %v469 = vshrl.u32 %v468, 7
  %v470 = vlaneseq
  %v471 = vand.u32 %v470, 127
  %v472 = vld [vmem:[%s1] sm:$0x3]
  %vm473 = vcmp.gt.s32.totalorder %v472, 0
  %v474 = vsel %vm473, 1, 0
  %v476 = vunpack.c.l.s4 1966171168
  %v477 = vunpack.c.0.s8 %v476
  %v478 = vlaneseq
  %v479 = vshrl.u32 %v478, 7
  %v480 = vsub.s32 %v477, %v479
  %v481 = vrot.slane %v474, %v480
  %v482 = vcombine.high %v481, %v481
  %v484 = vunpack.c.l.s4 1966171168
  %v485 = vunpack.c.0.s8 %v484
  %v486 = vlaneseq
  %v487 = vshrl.u32 %v486, 7
  %v488 = vsub.s32 %v485, %v487
  %v489 = vrot.slane %v481, %v488
  %v491 = vunpack.c.l.s4 1966171168
  %v492 = vunpack.c.0.s8 %v491
  %v493 = vlaneseq
  %v494 = vshrl.u32 %v493, 7
  %v495 = vsub.s32 %v492, %v494
  %v496 = vrot.slane %v482, %v495
  %vm497 = vcmp.ne.s32.totalorder %v489, 0
  %vm498 = vcmp.ne.s32.totalorder %v496, 0
  %vm499 = vcmp.le.s32.totalorder %v471, %v469
  %v500 = vsel %vm497, 1, 0
  %v501 = vsel %vm498, 1, 0
  %v502 = vlaneseq
  %v503 = vshrl.u32 %v502, 7
  %v504 = vsub.s32 0, %v503
  %v505 = vrot.slane %v500, %v504
  %v506 = vlaneseq
  %v507 = vshrl.u32 %v506, 7
  %v508 = vsub.s32 0, %v507
  %v509 = vrot.slane %v501, %v508
  %vm510 = vcmp.eq.s32.totalorder %v505, 1
  %vm511 = vcmp.eq.s32.totalorder %v509, 1
  %vm512 = vmand %vm499, %vm510
  %vm513 = vmand %vm499, %vm511
  %v514 = vsel %vm512, %v423, -1e+30
  %v515 = vsel %vm513, %v463, -1e+30
  %vm516 = vcmask 64512
  %v517 = vsel %vm516, %v514, -inf
  %518 = vmax.xlane.f32.xlu0 %v517
  %v519 = vpop.xlane.xlu0 %518
  %v520 = vsel %vm516, %v515, -inf
  %521 = vmax.xlane.f32.xlu0 %v520
  %v522 = vpop.xlane.xlu0 %521
  %v523 = vsub.f32 %v514, %v519
  %v524 = vsub.f32 %v515, %v522
  %v525 = vmul.f32 %v523, 1.442695
  %v526 = vpow.pop %v525
  %v527 = vmul.f32 %v524, 1.442695
  %v528 = vpow.pop %v527
  %v529 = vsel %vm516, %v526, 0.0
  %530 = vadd.xlane.f32.xlu0 %v529
  %v531 = vpop.xlane.xlu0 %530
  %v532 = vsel %vm516, %v528, 0.0
  %533 = vadd.xlane.f32.xlu0 %v532
  %v534 = vpop.xlane.xlu0 %533
  %v535 = vrcp.pop %v531
  %v536 = vrcp.pop %v534
  %v537 = vmul.f32 %v526, %v535
  %v538 = vmul.f32 %v528, %v536
  %v539 = vpack.c.bf16 %v537, %v537
  %v540 = vpack.c.bf16 %v538, %v538
  %v542 = vsel %vm516, %v539, 0
  %vm544 = vcmask 1043456
  %v546 = vsel %vm544, %v386, 0
  %548 = vmatprep.subr.bf16.mxu0 0
  %549 = vmatpush1.bf16.msra.mxu0 %v546
  %550 = vmatprep.subr.bf16.mxu0 0
  %551 = vmatpush1.bf16.msra.mxu0 0
  %552 = vmatprep.subr.bf16.mxu0 0
  %553 = vmatpush1.bf16.msra.mxu0 0
  %554 = vmatprep.subr.bf16.mxu0 0
  %555 = vmatpush1.bf16.msra.mxu0 0
  %556 = vmatprep.subr.bf16.mxu0 0
  %557 = vmatpush1.bf16.msra.mxu0 0
  %558 = vmatprep.subr.bf16.mxu0 0
  %559 = vmatpush1.bf16.msra.mxu0 0
  %560 = vmatprep.subr.bf16.mxu0 0
  %561 = vmatpush1.bf16.msra.mxu0 0
  %562 = vmatprep.subr.bf16.mxu0 0
  %563 = vmatpush1.bf16.msra.mxu0 0
  %564 = vmatprep.subr.bf16.mxu0 0
  %565 = vmatpush1.bf16.msra.mxu0 0
  %566 = vmatprep.subr.bf16.mxu0 0
  %567 = vmatpush1.bf16.msra.mxu0 0
  %568 = vmatprep.subr.bf16.mxu0 0
  %569 = vmatpush1.bf16.msra.mxu0 0
  %570 = vmatprep.subr.bf16.mxu0 0
  %571 = vmatpush1.bf16.msra.mxu0 0
  %572 = vmatprep.subr.bf16.mxu0 0
  %573 = vmatpush1.bf16.msra.mxu0 0
  %574 = vmatprep.subr.bf16.mxu0 0
  %575 = vmatpush1.bf16.msra.mxu0 0
  %576 = vmatprep.subr.bf16.mxu0 0
  %577 = vmatpush1.bf16.msra.mxu0 0
  %578 = vmatprep.subr.bf16.mxu0 0
  %579 = vmatpush1.bf16.msra.mxu0 0
  %580 = vmatprep.mubr.bf16.mxu0 0
  %581 = vmatmul.mubr.bf16.gmra.mrb[0].mxu0 %v542
  %v582 = vpop.f32.mrb[0].mxu0
  %v583 = vadd.f32 0.0, %v582
  %v584 = vpop.f32.mrb[0].mxu0
  %v585 = vpop.f32.mrb[0].mxu0
  %v586 = vpop.f32.mrb[0].mxu0
  %587 = vdwg.mxu0
  %v589 = vsel %vm516, %v540, 0
  %v592 = vsel %vm544, %v387, 0
  %594 = vmatprep.subr.bf16.mxu0 0
  %595 = vmatpush1.bf16.msra.mxu0 %v592
  %596 = vmatprep.subr.bf16.mxu0 0
  %597 = vmatpush1.bf16.msra.mxu0 0
  %598 = vmatprep.subr.bf16.mxu0 0
  %599 = vmatpush1.bf16.msra.mxu0 0
  %600 = vmatprep.subr.bf16.mxu0 0
  %601 = vmatpush1.bf16.msra.mxu0 0
  %602 = vmatprep.subr.bf16.mxu0 0
  %603 = vmatpush1.bf16.msra.mxu0 0
  %604 = vmatprep.subr.bf16.mxu0 0
  %605 = vmatpush1.bf16.msra.mxu0 0
  %606 = vmatprep.subr.bf16.mxu0 0
  %607 = vmatpush1.bf16.msra.mxu0 0
  %608 = vmatprep.subr.bf16.mxu0 0
  %609 = vmatpush1.bf16.msra.mxu0 0
  %610 = vmatprep.subr.bf16.mxu0 0
  %611 = vmatpush1.bf16.msra.mxu0 0
  %612 = vmatprep.subr.bf16.mxu0 0
  %613 = vmatpush1.bf16.msra.mxu0 0
  %614 = vmatprep.subr.bf16.mxu0 0
  %615 = vmatpush1.bf16.msra.mxu0 0
  %616 = vmatprep.subr.bf16.mxu0 0
  %617 = vmatpush1.bf16.msra.mxu0 0
  %618 = vmatprep.subr.bf16.mxu0 0
  %619 = vmatpush1.bf16.msra.mxu0 0
  %620 = vmatprep.subr.bf16.mxu0 0
  %621 = vmatpush1.bf16.msra.mxu0 0
  %622 = vmatprep.subr.bf16.mxu0 0
  %623 = vmatpush1.bf16.msra.mxu0 0
  %624 = vmatprep.subr.bf16.mxu0 0
  %625 = vmatpush1.bf16.msra.mxu0 0
  %626 = vmatprep.mubr.bf16.mxu0 0
  %627 = vmatmul.mubr.bf16.gmra.mrb[0].mxu0 %v589
  %v628 = vpop.f32.mrb[0].mxu0
  %v629 = vadd.f32 0.0, %v628
  %v630 = vpop.f32.mrb[0].mxu0
  %v631 = vpop.f32.mrb[0].mxu0
  %v632 = vpop.f32.mrb[0].mxu0
  %633 = vdwg.mxu0
  %v634 = vpack.c.bf16 %v629, %v583
  %v635 = vld [vmem:[%s5] sm:$0xf]
  %v636 = vld [vmem:[%s5 + $0x4] sm:$0xf]
  %v637 = vld [vmem:[%s5 + $0x8] sm:$0xf]
  %v638 = vld [vmem:[%s5 + $0xc] sm:$0xf]
  %v639 = vld [vmem:[%s5 + $0x10] sm:$0xf]
  %v640 = vld [vmem:[%s5 + $0x14] sm:$0xf]
  %v641 = vld [vmem:[%s5 + $0x18] sm:$0xf]
  %v642 = vld [vmem:[%s5 + $0x1c] sm:$0xf]
  %v643 = vld [vmem:[%s5 + $0x20] sm:$0xf]
  %v644 = vld [vmem:[%s5 + $0x24] sm:$0xf]
  %v645 = vld [vmem:[%s5 + $0x28] sm:$0xf]
  %v646 = vld [vmem:[%s5 + $0x2c] sm:$0xf]
  %v647 = vld [vmem:[%s5 + $0x30] sm:$0xf]
  %v648 = vld [vmem:[%s5 + $0x34] sm:$0xf]
  %v649 = vld [vmem:[%s5 + $0x38] sm:$0xf]
  %v650 = vld [vmem:[%s5 + $0x3c] sm:$0xf]
  %v667 = vunpack.c.l.b16 %v635
  %v668 = vunpack.c.l.b16 %v636
  %v669 = vunpack.c.l.b16 %v637
  %v670 = vunpack.c.l.b16 %v638
  %v671 = vunpack.c.l.b16 %v639
  %v672 = vunpack.c.l.b16 %v640
  %v673 = vunpack.c.l.b16 %v641
  %v674 = vunpack.c.l.b16 %v642
  %v675 = vunpack.c.l.b16 %v643
  %v676 = vunpack.c.l.b16 %v644
  %v677 = vunpack.c.l.b16 %v645
  %v678 = vunpack.c.l.b16 %v646
  %v679 = vunpack.c.l.b16 %v647
  %v680 = vunpack.c.l.b16 %v648
  %v681 = vunpack.c.l.b16 %v649
  %v682 = vunpack.c.l.b16 %v650
  %v683 = vpack.c.b16 %v668, %v667
  %v684 = vpack.c.b16 %v670, %v669
  %v685 = vpack.c.b16 %v672, %v671
  %v686 = vpack.c.b16 %v674, %v673
  %v687 = vpack.c.b16 %v676, %v675
  %v688 = vpack.c.b16 %v678, %v677
  %v689 = vpack.c.b16 %v680, %v679
  %v690 = vpack.c.b16 %v682, %v681
  %699 = vmatprep.subr.bf16.mxu0 0
  %700 = vmatpush1.bf16.msra.mxu0 %v683
  %701 = vmatprep.subr.bf16.mxu0 0
  %702 = vmatpush1.bf16.msra.mxu0 %v684
  %703 = vmatprep.subr.bf16.mxu0 0
  %704 = vmatpush1.bf16.msra.mxu0 %v685
  %705 = vmatprep.subr.bf16.mxu0 0
  %706 = vmatpush1.bf16.msra.mxu0 %v686
  %707 = vmatprep.subr.bf16.mxu0 0
  %708 = vmatpush1.bf16.msra.mxu0 %v687
  %709 = vmatprep.subr.bf16.mxu0 0
  %710 = vmatpush1.bf16.msra.mxu0 %v688
  %711 = vmatprep.subr.bf16.mxu0 0
  %712 = vmatpush1.bf16.msra.mxu0 %v689
  %713 = vmatprep.subr.bf16.mxu0 0
  %714 = vmatpush1.bf16.msra.mxu0 %v690
  %715 = vmatprep.subr.bf16.mxu0 0
  %716 = vmatpush1.bf16.msra.mxu0 0
  %717 = vmatprep.subr.bf16.mxu0 0
  %718 = vmatpush1.bf16.msra.mxu0 0
  %719 = vmatprep.subr.bf16.mxu0 0
  %720 = vmatpush1.bf16.msra.mxu0 0
  %721 = vmatprep.subr.bf16.mxu0 0
  %722 = vmatpush1.bf16.msra.mxu0 0
  %723 = vmatprep.subr.bf16.mxu0 0
  %724 = vmatpush1.bf16.msra.mxu0 0
  %725 = vmatprep.subr.bf16.mxu0 0
  %726 = vmatpush1.bf16.msra.mxu0 0
  %727 = vmatprep.subr.bf16.mxu0 0
  %728 = vmatpush1.bf16.msra.mxu0 0
  %729 = vmatprep.subr.bf16.mxu0 0
  %730 = vmatpush1.bf16.msra.mxu0 0
  %731 = vmatprep.mubr.bf16.mxu0 0
  %732 = vmatmul.mubr.bf16.gmra.mrb[0].mxu0 %v634
  %v733 = vpop.f32.mrb[0].mxu0
  %v734 = vadd.f32 0.0, %v733
  %v735 = vpop.f32.mrb[0].mxu0
  %v736 = vpop.f32.mrb[0].mxu0
  %v737 = vadd.f32 0.0, %v736
  %v738 = vpop.f32.mrb[0].mxu0
  %739 = vdwg.mxu0
  %v740 = vadd.f32 %v41, %v734
  %v741 = vadd.f32 %v42, %v737
  %v742 = vmul.f32 %v740, %v740
  %v743 = vmul.f32 %v741, %v741
  %744 = vadd.xlane.f32.xlu0 %v742
  %v745 = vpop.xlane.xlu0 %744
  %746 = vadd.xlane.f32.xlu0 %v743
  %v747 = vpop.xlane.xlu0 %746
  %v748 = vmul.f32 %v745, %v49
  %v749 = vmul.f32 %v747, %v49
  %v750 = vadd.f32 %v748, 1e-06
  %v751 = vadd.f32 %v749, 1e-06
  %v752 = vrsqrt.pop %v750
  %v753 = vrsqrt.pop %v751
  %v754 = vmul.f32 %v740, %v752
  %v755 = vmul.f32 %v741, %v753
  %v756 = vld [vmem:[%s9] sm:$0x1]
  %v757 = vunpack.c.l.bf16 %v756
  %v758 = vlaneseq
  %v759 = vshrl.u32 %v758, 7
  %v760 = vsub.s32 0, %v759
  %v761 = vrot.slane %v757, %v760
  %v762 = vmul.f32 %v754, %v761
  %v763 = vmul.f32 %v755, %v761
  %v764 = vpack.c.bf16 %v763, %v762
  %v765 = vld [vmem:[%s6] sm:$0xff]
  %v766 = vld [vmem:[%s6 + $0x8] sm:$0xff]
  %v767 = vld [vmem:[%s6 + $0x10] sm:$0xff]
  %v768 = vld [vmem:[%s6 + $0x18] sm:$0xff]
  %v769 = vld [vmem:[%s6 + $0x20] sm:$0xff]
  %v770 = vld [vmem:[%s6 + $0x28] sm:$0xff]
  %v771 = vld [vmem:[%s6 + $0x30] sm:$0xff]
  %v772 = vld [vmem:[%s6 + $0x38] sm:$0xff]
  %v773 = vld [vmem:[%s6 + $0x40] sm:$0xff]
  %v774 = vld [vmem:[%s6 + $0x48] sm:$0xff]
  %v775 = vld [vmem:[%s6 + $0x50] sm:$0xff]
  %v776 = vld [vmem:[%s6 + $0x58] sm:$0xff]
  %v777 = vld [vmem:[%s6 + $0x60] sm:$0xff]
  %v778 = vld [vmem:[%s6 + $0x68] sm:$0xff]
  %v779 = vld [vmem:[%s6 + $0x70] sm:$0xff]
  %v780 = vld [vmem:[%s6 + $0x78] sm:$0xff]
  %v797 = vunpack.c.l.b16 %v765
  %v798 = vunpack.c.h.b16 %v765
  %v799 = vunpack.c.l.b16 %v766
  %v800 = vunpack.c.h.b16 %v766
  %v801 = vunpack.c.l.b16 %v767
  %v802 = vunpack.c.h.b16 %v767
  %v803 = vunpack.c.l.b16 %v768
  %v804 = vunpack.c.h.b16 %v768
  %v805 = vunpack.c.l.b16 %v769
  %v806 = vunpack.c.h.b16 %v769
  %v807 = vunpack.c.l.b16 %v770
  %v808 = vunpack.c.h.b16 %v770
  %v809 = vunpack.c.l.b16 %v771
  %v810 = vunpack.c.h.b16 %v771
  %v811 = vunpack.c.l.b16 %v772
  %v812 = vunpack.c.h.b16 %v772
  %v813 = vunpack.c.l.b16 %v773
  %v814 = vunpack.c.h.b16 %v773
  %v815 = vunpack.c.l.b16 %v774
  %v816 = vunpack.c.h.b16 %v774
  %v817 = vunpack.c.l.b16 %v775
  %v818 = vunpack.c.h.b16 %v775
  %v819 = vunpack.c.l.b16 %v776
  %v820 = vunpack.c.h.b16 %v776
  %v821 = vunpack.c.l.b16 %v777
  %v822 = vunpack.c.h.b16 %v777
  %v823 = vunpack.c.l.b16 %v778
  %v824 = vunpack.c.h.b16 %v778
  %v825 = vunpack.c.l.b16 %v779
  %v826 = vunpack.c.h.b16 %v779
  %v827 = vunpack.c.l.b16 %v780
  %v828 = vunpack.c.h.b16 %v780
  %v829 = vpack.c.b16 %v799, %v797
  %v830 = vpack.c.b16 %v800, %v798
  %v831 = vpack.c.b16 %v803, %v801
  %v832 = vpack.c.b16 %v804, %v802
  %v833 = vpack.c.b16 %v807, %v805
  %v834 = vpack.c.b16 %v808, %v806
  %v835 = vpack.c.b16 %v811, %v809
  %v836 = vpack.c.b16 %v812, %v810
  %v837 = vpack.c.b16 %v815, %v813
  %v838 = vpack.c.b16 %v816, %v814
  %v839 = vpack.c.b16 %v819, %v817
  %v840 = vpack.c.b16 %v820, %v818
  %v841 = vpack.c.b16 %v823, %v821
  %v842 = vpack.c.b16 %v824, %v822
  %v843 = vpack.c.b16 %v827, %v825
  %v844 = vpack.c.b16 %v828, %v826
  %861 = vmatprep.subr.bf16.mxu0 %v830
  %862 = vmatpush1.bf16.msra.mxu0 %v829
  %863 = vmatprep.subr.bf16.mxu0 %v832
  %864 = vmatpush1.bf16.msra.mxu0 %v831
  %865 = vmatprep.subr.bf16.mxu0 %v834
  %866 = vmatpush1.bf16.msra.mxu0 %v833
  %867 = vmatprep.subr.bf16.mxu0 %v836
  %868 = vmatpush1.bf16.msra.mxu0 %v835
  %869 = vmatprep.subr.bf16.mxu0 %v838
  %870 = vmatpush1.bf16.msra.mxu0 %v837
  %871 = vmatprep.subr.bf16.mxu0 %v840
  %872 = vmatpush1.bf16.msra.mxu0 %v839
  %873 = vmatprep.subr.bf16.mxu0 %v842
  %874 = vmatpush1.bf16.msra.mxu0 %v841
  %875 = vmatprep.subr.bf16.mxu0 %v844
  %876 = vmatpush1.bf16.msra.mxu0 %v843
  %877 = vmatprep.subr.bf16.mxu0 0
  %878 = vmatpush1.bf16.msra.mxu0 0
  %879 = vmatprep.subr.bf16.mxu0 0
  %880 = vmatpush1.bf16.msra.mxu0 0
  %881 = vmatprep.subr.bf16.mxu0 0
  %882 = vmatpush1.bf16.msra.mxu0 0
  %883 = vmatprep.subr.bf16.mxu0 0
  %884 = vmatpush1.bf16.msra.mxu0 0
  %885 = vmatprep.subr.bf16.mxu0 0
  %886 = vmatpush1.bf16.msra.mxu0 0
  %887 = vmatprep.subr.bf16.mxu0 0
  %888 = vmatpush1.bf16.msra.mxu0 0
  %889 = vmatprep.subr.bf16.mxu0 0
  %890 = vmatpush1.bf16.msra.mxu0 0
  %891 = vmatprep.subr.bf16.mxu0 0
  %892 = vmatpush1.bf16.msra.mxu0 0
  %893 = vmatprep.mubr.bf16.mxu0 0
  %894 = vmatmul.mubr.bf16.gmra.mrb[0].mxu0 %v764
  %v895 = vpop.f32.mrb[0].mxu0
  %v896 = vadd.f32 0.0, %v895
  %v897 = vpop.f32.mrb[0].mxu0
  %v898 = vadd.f32 0.0, %v897
  %v899 = vpop.f32.mrb[0].mxu0
  %v900 = vadd.f32 0.0, %v899
  %v901 = vpop.f32.mrb[0].mxu0
  %v902 = vadd.f32 0.0, %v901
  %903 = vdwg.mxu0
  %v904 = vmul.f32 %v896, %v896
  %v905 = vmul.f32 %v898, %v898
  %v906 = vmul.f32 %v900, %v900
  %v907 = vmul.f32 %v902, %v902
  %v908 = vmul.f32 %v896, %v904
  %v909 = vmul.f32 %v898, %v905
  %v910 = vmul.f32 %v900, %v906
  %v911 = vmul.f32 %v902, %v907
  %v912 = vmul.f32 %v908, 0.044715
  %v913 = vmul.f32 %v909, 0.044715
  %v914 = vmul.f32 %v910, 0.044715
  %v915 = vmul.f32 %v911, 0.044715
  %v916 = vadd.f32 %v896, %v912
  %v917 = vadd.f32 %v898, %v913
  %v918 = vadd.f32 %v900, %v914
  %v919 = vadd.f32 %v902, %v915
  %v920 = vmul.f32 %v916, 0.7978846
  %v921 = vmul.f32 %v917, 0.7978846
  %v922 = vmul.f32 %v918, 0.7978846
  %v923 = vmul.f32 %v919, 0.7978846
  %v924 = vtanh.pop %v920
  %v925 = vtanh.pop %v921
  %v926 = vtanh.pop %v922
  %v927 = vtanh.pop %v923
  %v928 = vadd.f32 %v924, 1.0
  %v929 = vadd.f32 %v925, 1.0
  %v930 = vadd.f32 %v926, 1.0
  %v931 = vadd.f32 %v927, 1.0
  %v932 = vmul.f32 %v928, 0.5
  %v933 = vmul.f32 %v929, 0.5
  %v934 = vmul.f32 %v930, 0.5
  %v935 = vmul.f32 %v931, 0.5
  %v936 = vmul.f32 %v896, %v932
  %v937 = vmul.f32 %v898, %v933
  %v938 = vmul.f32 %v900, %v934
  %v939 = vmul.f32 %v902, %v935
  %v940 = vpack.c.bf16 %v938, %v936
  %v941 = vpack.c.bf16 %v939, %v937
  %v942 = vld [vmem:[%s7] sm:$0xf]
  %v943 = vld [vmem:[%s7 + $0x4] sm:$0xf]
  %v944 = vld [vmem:[%s7 + $0x8] sm:$0xf]
  %v945 = vld [vmem:[%s7 + $0xc] sm:$0xf]
  %v946 = vld [vmem:[%s7 + $0x10] sm:$0xf]
  %v947 = vld [vmem:[%s7 + $0x14] sm:$0xf]
  %v948 = vld [vmem:[%s7 + $0x18] sm:$0xf]
  %v949 = vld [vmem:[%s7 + $0x1c] sm:$0xf]
  %v950 = vld [vmem:[%s7 + $0x20] sm:$0xf]
  %v951 = vld [vmem:[%s7 + $0x24] sm:$0xf]
  %v952 = vld [vmem:[%s7 + $0x28] sm:$0xf]
  %v953 = vld [vmem:[%s7 + $0x2c] sm:$0xf]
  %v954 = vld [vmem:[%s7 + $0x30] sm:$0xf]
  %v955 = vld [vmem:[%s7 + $0x34] sm:$0xf]
  %v956 = vld [vmem:[%s7 + $0x38] sm:$0xf]
  %v957 = vld [vmem:[%s7 + $0x3c] sm:$0xf]
  %v958 = vld [vmem:[%s7 + $0x40] sm:$0xf]
  %v959 = vld [vmem:[%s7 + $0x44] sm:$0xf]
  %v960 = vld [vmem:[%s7 + $0x48] sm:$0xf]
  %v961 = vld [vmem:[%s7 + $0x4c] sm:$0xf]
  %v962 = vld [vmem:[%s7 + $0x50] sm:$0xf]
  %v963 = vld [vmem:[%s7 + $0x54] sm:$0xf]
  %v964 = vld [vmem:[%s7 + $0x58] sm:$0xf]
  %v965 = vld [vmem:[%s7 + $0x5c] sm:$0xf]
  %v966 = vld [vmem:[%s7 + $0x60] sm:$0xf]
  %v967 = vld [vmem:[%s7 + $0x64] sm:$0xf]
  %v968 = vld [vmem:[%s7 + $0x68] sm:$0xf]
  %v969 = vld [vmem:[%s7 + $0x6c] sm:$0xf]
  %v970 = vld [vmem:[%s7 + $0x70] sm:$0xf]
  %v971 = vld [vmem:[%s7 + $0x74] sm:$0xf]
  %v972 = vld [vmem:[%s7 + $0x78] sm:$0xf]
  %v973 = vld [vmem:[%s7 + $0x7c] sm:$0xf]
  %v1006 = vunpack.c.l.b16 %v942
  %v1007 = vunpack.c.l.b16 %v943
  %v1008 = vunpack.c.l.b16 %v944
  %v1009 = vunpack.c.l.b16 %v945
  %v1010 = vunpack.c.l.b16 %v946
  %v1011 = vunpack.c.l.b16 %v947
  %v1012 = vunpack.c.l.b16 %v948
  %v1013 = vunpack.c.l.b16 %v949
  %v1014 = vunpack.c.l.b16 %v950
  %v1015 = vunpack.c.l.b16 %v951
  %v1016 = vunpack.c.l.b16 %v952
  %v1017 = vunpack.c.l.b16 %v953
  %v1018 = vunpack.c.l.b16 %v954
  %v1019 = vunpack.c.l.b16 %v955
  %v1020 = vunpack.c.l.b16 %v956
  %v1021 = vunpack.c.l.b16 %v957
  %v1022 = vunpack.c.l.b16 %v958
  %v1023 = vunpack.c.l.b16 %v959
  %v1024 = vunpack.c.l.b16 %v960
  %v1025 = vunpack.c.l.b16 %v961
  %v1026 = vunpack.c.l.b16 %v962
  %v1027 = vunpack.c.l.b16 %v963
  %v1028 = vunpack.c.l.b16 %v964
  %v1029 = vunpack.c.l.b16 %v965
  %v1030 = vunpack.c.l.b16 %v966
  %v1031 = vunpack.c.l.b16 %v967
  %v1032 = vunpack.c.l.b16 %v968
  %v1033 = vunpack.c.l.b16 %v969
  %v1034 = vunpack.c.l.b16 %v970
  %v1035 = vunpack.c.l.b16 %v971
  %v1036 = vunpack.c.l.b16 %v972
  %v1037 = vunpack.c.l.b16 %v973
  %v1038 = vpack.c.b16 %v1007, %v1006
  %v1039 = vpack.c.b16 %v1009, %v1008
  %v1040 = vpack.c.b16 %v1011, %v1010
  %v1041 = vpack.c.b16 %v1013, %v1012
  %v1042 = vpack.c.b16 %v1015, %v1014
  %v1043 = vpack.c.b16 %v1017, %v1016
  %v1044 = vpack.c.b16 %v1019, %v1018
  %v1045 = vpack.c.b16 %v1021, %v1020
  %v1046 = vpack.c.b16 %v1023, %v1022
  %v1047 = vpack.c.b16 %v1025, %v1024
  %v1048 = vpack.c.b16 %v1027, %v1026
  %v1049 = vpack.c.b16 %v1029, %v1028
  %v1050 = vpack.c.b16 %v1031, %v1030
  %v1051 = vpack.c.b16 %v1033, %v1032
  %v1052 = vpack.c.b16 %v1035, %v1034
  %v1053 = vpack.c.b16 %v1037, %v1036
  %1070 = vmatprep.subr.bf16.mxu0 0
  %1071 = vmatpush1.bf16.msra.mxu0 %v1038
  %1072 = vmatprep.subr.bf16.mxu0 0
  %1073 = vmatpush1.bf16.msra.mxu0 %v1039
  %1074 = vmatprep.subr.bf16.mxu0 0
  %1075 = vmatpush1.bf16.msra.mxu0 %v1040
  %1076 = vmatprep.subr.bf16.mxu0 0
  %1077 = vmatpush1.bf16.msra.mxu0 %v1041
  %1078 = vmatprep.subr.bf16.mxu0 0
  %1079 = vmatpush1.bf16.msra.mxu0 %v1042
  %1080 = vmatprep.subr.bf16.mxu0 0
  %1081 = vmatpush1.bf16.msra.mxu0 %v1043
  %1082 = vmatprep.subr.bf16.mxu0 0
  %1083 = vmatpush1.bf16.msra.mxu0 %v1044
  %1084 = vmatprep.subr.bf16.mxu0 0
  %1085 = vmatpush1.bf16.msra.mxu0 %v1045
  %1086 = vmatprep.subr.bf16.mxu0 0
  %1087 = vmatpush1.bf16.msra.mxu0 %v1046
  %1088 = vmatprep.subr.bf16.mxu0 0
  %1089 = vmatpush1.bf16.msra.mxu0 %v1047
  %1090 = vmatprep.subr.bf16.mxu0 0
  %1091 = vmatpush1.bf16.msra.mxu0 %v1048
  %1092 = vmatprep.subr.bf16.mxu0 0
  %1093 = vmatpush1.bf16.msra.mxu0 %v1049
  %1094 = vmatprep.subr.bf16.mxu0 0
  %1095 = vmatpush1.bf16.msra.mxu0 %v1050
  %1096 = vmatprep.subr.bf16.mxu0 0
  %1097 = vmatpush1.bf16.msra.mxu0 %v1051
  %1098 = vmatprep.subr.bf16.mxu0 0
  %1099 = vmatpush1.bf16.msra.mxu0 %v1052
  %1100 = vmatprep.subr.bf16.mxu0 0
  %1101 = vmatpush1.bf16.msra.mxu0 %v1053
  %1102 = vmatprep.mubr.bf16.mxu0 %v941
  %1103 = vmatmul.mubr.bf16.gmra.mrb[0].mxu0 %v940
  %v1104 = vpop.f32.mrb[0].mxu0
  %v1105 = vadd.f32 0.0, %v1104
  %v1106 = vpop.f32.mrb[0].mxu0
  %v1107 = vpop.f32.mrb[0].mxu0
  %v1108 = vadd.f32 0.0, %v1107
  %v1109 = vpop.f32.mrb[0].mxu0
  %1110 = vdwg.mxu0
  %v1111 = vadd.f32 %v740, %v1105
  %v1112 = vadd.f32 %v741, %v1108
  %v1113 = vpack.c.bf16 %v1112, %v1111
  %v1114 = vld [vmem:[%s10] sm:$0xff]
  %v1115 = vld [vmem:[%s10 + $0x8] sm:$0xff]
  %v1116 = vld [vmem:[%s10 + $0x10] sm:$0xff]
  %v1117 = vld [vmem:[%s10 + $0x18] sm:$0xff]
  %v1118 = vld [vmem:[%s10 + $0x20] sm:$0xff]
  %v1119 = vld [vmem:[%s10 + $0x28] sm:$0xff]
  %v1120 = vld [vmem:[%s10 + $0x30] sm:$0xff]
  %v1121 = vld [vmem:[%s10 + $0x38] sm:$0xff]
  %v1122 = vld [vmem:[%s10 + $0x40] sm:$0xff]
  %v1123 = vld [vmem:[%s10 + $0x48] sm:$0xff]
  %v1124 = vld [vmem:[%s10 + $0x50] sm:$0xff]
  %v1125 = vld [vmem:[%s10 + $0x58] sm:$0xff]
  %v1126 = vld [vmem:[%s10 + $0x60] sm:$0xff]
  %v1127 = vld [vmem:[%s10 + $0x68] sm:$0xff]
  %v1128 = vld [vmem:[%s10 + $0x70] sm:$0xff]
  %v1129 = vld [vmem:[%s10 + $0x78] sm:$0xff]
  %v1146 = vunpack.c.l.b16 %v1114
  %v1147 = vunpack.c.h.b16 %v1114
  %v1148 = vunpack.c.l.b16 %v1115
  %v1149 = vunpack.c.h.b16 %v1115
  %v1150 = vunpack.c.l.b16 %v1116
  %v1151 = vunpack.c.h.b16 %v1116
  %v1152 = vunpack.c.l.b16 %v1117
  %v1153 = vunpack.c.h.b16 %v1117
  %v1154 = vunpack.c.l.b16 %v1118
  %v1155 = vunpack.c.h.b16 %v1118
  %v1156 = vunpack.c.l.b16 %v1119
  %v1157 = vunpack.c.h.b16 %v1119
  %v1158 = vunpack.c.l.b16 %v1120
  %v1159 = vunpack.c.h.b16 %v1120
  %v1160 = vunpack.c.l.b16 %v1121
  %v1161 = vunpack.c.h.b16 %v1121
  %v1162 = vunpack.c.l.b16 %v1122
  %v1163 = vunpack.c.h.b16 %v1122
  %v1164 = vunpack.c.l.b16 %v1123
  %v1165 = vunpack.c.h.b16 %v1123
  %v1166 = vunpack.c.l.b16 %v1124
  %v1167 = vunpack.c.h.b16 %v1124
  %v1168 = vunpack.c.l.b16 %v1125
  %v1169 = vunpack.c.h.b16 %v1125
  %v1170 = vunpack.c.l.b16 %v1126
  %v1171 = vunpack.c.h.b16 %v1126
  %v1172 = vunpack.c.l.b16 %v1127
  %v1173 = vunpack.c.h.b16 %v1127
  %v1174 = vunpack.c.l.b16 %v1128
  %v1175 = vunpack.c.h.b16 %v1128
  %v1176 = vunpack.c.l.b16 %v1129
  %v1177 = vunpack.c.h.b16 %v1129
  %v1178 = vpack.c.b16 %v1148, %v1146
  %v1179 = vpack.c.b16 %v1149, %v1147
  %v1180 = vpack.c.b16 %v1152, %v1150
  %v1181 = vpack.c.b16 %v1153, %v1151
  %v1182 = vpack.c.b16 %v1156, %v1154
  %v1183 = vpack.c.b16 %v1157, %v1155
  %v1184 = vpack.c.b16 %v1160, %v1158
  %v1185 = vpack.c.b16 %v1161, %v1159
  %v1186 = vpack.c.b16 %v1164, %v1162
  %v1187 = vpack.c.b16 %v1165, %v1163
  %v1188 = vpack.c.b16 %v1168, %v1166
  %v1189 = vpack.c.b16 %v1169, %v1167
  %v1190 = vpack.c.b16 %v1172, %v1170
  %v1191 = vpack.c.b16 %v1173, %v1171
  %v1192 = vpack.c.b16 %v1176, %v1174
  %v1193 = vpack.c.b16 %v1177, %v1175
  %1210 = vmatprep.subr.bf16.mxu0 %v1179
  %1211 = vmatpush1.bf16.msra.mxu0 %v1178
  %1212 = vmatprep.subr.bf16.mxu0 %v1181
  %1213 = vmatpush1.bf16.msra.mxu0 %v1180
  %1214 = vmatprep.subr.bf16.mxu0 %v1183
  %1215 = vmatpush1.bf16.msra.mxu0 %v1182
  %1216 = vmatprep.subr.bf16.mxu0 %v1185
  %1217 = vmatpush1.bf16.msra.mxu0 %v1184
  %1218 = vmatprep.subr.bf16.mxu0 %v1187
  %1219 = vmatpush1.bf16.msra.mxu0 %v1186
  %1220 = vmatprep.subr.bf16.mxu0 %v1189
  %1221 = vmatpush1.bf16.msra.mxu0 %v1188
  %1222 = vmatprep.subr.bf16.mxu0 %v1191
  %1223 = vmatpush1.bf16.msra.mxu0 %v1190
  %1224 = vmatprep.subr.bf16.mxu0 %v1193
  %1225 = vmatpush1.bf16.msra.mxu0 %v1192
  %1226 = vmatprep.subr.bf16.mxu0 0
  %1227 = vmatpush1.bf16.msra.mxu0 0
  %1228 = vmatprep.subr.bf16.mxu0 0
  %1229 = vmatpush1.bf16.msra.mxu0 0
  %1230 = vmatprep.subr.bf16.mxu0 0
  %1231 = vmatpush1.bf16.msra.mxu0 0
  %1232 = vmatprep.subr.bf16.mxu0 0
  %1233 = vmatpush1.bf16.msra.mxu0 0
  %1234 = vmatprep.subr.bf16.mxu0 0
  %1235 = vmatpush1.bf16.msra.mxu0 0
  %1236 = vmatprep.subr.bf16.mxu0 0
  %1237 = vmatpush1.bf16.msra.mxu0 0
  %1238 = vmatprep.subr.bf16.mxu0 0
  %1239 = vmatpush1.bf16.msra.mxu0 0
  %1240 = vmatprep.subr.bf16.mxu0 0
  %1241 = vmatpush1.bf16.msra.mxu0 0
  %1242 = vmatprep.mubr.bf16.mxu0 0
  %1243 = vmatmul.mubr.bf16.gmra.mrb[0].mxu0 %v1113
  %v1244 = vpop.f32.mrb[0].mxu0
  %v1245 = vadd.f32 0.0, %v1244
  %v1246 = vpop.f32.mrb[0].mxu0
  %v1247 = vadd.f32 0.0, %v1246
  %v1248 = vpop.f32.mrb[0].mxu0
  %v1249 = vadd.f32 0.0, %v1248
  %v1250 = vpop.f32.mrb[0].mxu0
  %v1251 = vadd.f32 0.0, %v1250
  %1252 = vdwg.mxu0
  %v1253 = vpack.c.bf16 %v1245, %v1245
  %v1254 = vpack.c.bf16 %v1247, %v1247
  %v1255 = vpack.c.bf16 %v1249, %v1249
  %v1256 = vpack.c.bf16 %v1251, %v1251
  %v1261 = vunpack.c.l.b16 %v1253
  %v1262 = vunpack.c.l.b16 %v1254
  %v1263 = vunpack.c.l.b16 %v1255
  %v1264 = vunpack.c.l.b16 %v1256
  %v1265 = vpack.c.b16 %v1262, %v1261
  %v1266 = vpack.c.b16 %v1264, %v1263
  %1269 = vst [vmem:[%s11] sm:$0xff] %v1265
  %1270 = vst [vmem:[%s11 + $0x8] sm:$0xff] %v1266
  // Predicated region
  $region46: #{pruned_model_forward.3} parent=0 // pred_check
    _
  $region47: #{pruned_model_forward.3} parent=0 // pred_check_branch
    %1272 = sbr.rel (0) target = $region49
  $region48: #{pruned_model_forward.3} parent=0 // pred_region
    _
  $region49: #{pruned_model_forward.3} parent=0 // pred_fallthru
    _
  // Predicated region
  $region50: #{pruned_model_forward.3} parent=0 // pred_check
    _
  $region51: #{pruned_model_forward.3} parent=0 // pred_check_branch
    %1274 = sbr.rel (0) target = $region53
  $region52: #{pruned_model_forward.3} parent=0 // pred_region
    _
  $region53: #{pruned_model_forward.3} parent=0 // pred_fallthru
    _

</llo_original>
